<compile_context>
chip_gen: v7x
topology: tpu7x:2x2x1
jax: 0.10.0
libtpu: 0.0.40
codegen_flags: <defaults>
</compile_context>

<pallas_src>
import jax
import jax.numpy as jnp
from jax.experimental import pallas as pl
from jax.experimental.pallas import tpu as pltpu

# (in_features, out_features) per layer, matching the PyTorch module.
_DIMS = ((3, 6), (6, 8), (8, 8), (8, 6), (6, 4))
_N_W = sum(fi * fo for fi, fo in _DIMS)      # 202 weight scalars
_N_B = sum(fo for _, fo in _DIMS)            # 32 bias scalars
_LANE_PACK = 8 * 128                         # rows per dense (8,128) vreg tile
_SMALL_BATCH = 4096                          # below this, plain jnp wins


def _round_up(n, m):
    return (n + m - 1) // m * m


def _mlp_kernel(p_ref, x_ref, o_ref):
    """p_ref: (234,) f32 SMEM (scalar prefetch); x_ref: (3,8,bc); o_ref: (4,8,bc)."""
    bc = x_ref.shape[-1]
    # 256 lanes -> 2 vregs per feature tile, <= ~32 live vregs in the chunk body.
    chunk = 256 if bc % 256 == 0 else 128
    n_chunks = bc // chunk

    # Hoist all 234 scalar (sld) reads out of the chunk loop; the loop body
    # closes over them, so the body is pure mul/add/max on the VPU.
    w_off, b_off = 0, _N_W
    layer_params = []
    for fi, fo in _DIMS:
        w = [[p_ref[w_off + j * fi + k] for k in range(fi)] for j in range(fo)]
        b = [p_ref[b_off + j] for j in range(fo)]
        layer_params.append((w, b))
        w_off += fi * fo
        b_off += fo

    n_layers = len(_DIMS)
    out_f = _DIMS[-1][1]

    # NOTE: an optional bf16 MAC path would ~2x VALU throughput on v6e/v7x but
    # breaks the f32 1e-5 tolerance and hurts v5e, so it is intentionally omitted.
    def compute_chunk(start):
        h = [x_ref[k, :, pl.ds(start, chunk)] for k in range(_DIMS[0][0])]
        for li, (fi, fo) in enumerate(_DIMS):
            w, b = layer_params[li]
            is_last = li == n_layers - 1
            nxt = []
            for j in range(fo):
                acc = h[0] * w[j][0]
                for k in range(1, fi):
                    acc = acc + h[k] * w[j][k]
                acc = acc + b[j]
                nxt.append(acc if is_last else jnp.maximum(acc, 0.0))
            h = nxt
        for j in range(out_f):
            o_ref[j, :, pl.ds(start, chunk)] = h[j]

    if n_chunks == 1:
        compute_chunk(0)
    else:
        def body(c, carry):
            compute_chunk(pl.multiple_of(c * chunk, chunk))
            return carry
        jax.lax.fori_loop(0, n_chunks, body, None)


def _select_tile(rows, block_batch):
    """Rows per grid step (multiple of 1024) and padded batch (multiple of it)."""
    b_min = _round_up(max(rows, 1), _LANE_PACK)
    bm = min(_round_up(block_batch, _LANE_PACK), b_min)
    if b_min >= 2 * _LANE_PACK:
        # Keep >= 2 grid steps so both v7x TensorCores get work (harmless on 1-TC chips).
        bm = min(bm, (b_min // 2) // _LANE_PACK * _LANE_PACK)
    bm = max(bm, _LANE_PACK)
    return bm, _round_up(b_min, bm)


def pack_params(params):
    """Flatten the 5 (out,in) weights + 5 (out,) biases into one f32 vector."""
    ws = [params[f"w{i}"].reshape(-1) for i in range(1, 6)]
    bs = [params[f"b{i}"].reshape(-1) for i in range(1, 6)]
    return jnp.concatenate(ws + bs).astype(jnp.float32)


def pack_input(x, rows_padded):
    """(B, 3) -> (3, 8, rows_padded//8) batch-on-lanes layout (zero padded)."""
    B, in_dim = x.shape
    x_t = jnp.pad(x.astype(jnp.float32).T, ((0, 0), (0, rows_padded - B)))
    return x_t.reshape(in_dim, 8, rows_padded // 8)


def unpack_output(out_packed, B):
    """(4, 8, R) -> (B, 4)."""
    out_f = out_packed.shape[0]
    return out_packed.reshape(out_f, -1).T[:B]


def _pallas_packed_forward(x_packed, p_flat, bm):
    in_dim, sub, cols = x_packed.shape
    assert in_dim == _DIMS[0][0] and sub == 8
    rows = sub * cols
    assert rows % bm == 0, "padded rows must be a multiple of the batch tile"
    bc = bm // 8
    out_f = _DIMS[-1][1]
    flops = (2 * _N_W + _N_B + sum(fo for _, fo in _DIMS[:-1])) * rows
    bytes_accessed = 4 * ((in_dim + out_f) * rows + _N_W + _N_B)

    return pl.pallas_call(
        _mlp_kernel,
        out_shape=jax.ShapeDtypeStruct((out_f, 8, cols), jnp.float32),
        grid_spec=pltpu.PrefetchScalarGridSpec(
            num_scalar_prefetch=1,                      # params -> one SMEM residency
            grid=(rows // bm,),
            in_specs=[pl.BlockSpec((in_dim, 8, bc), lambda i, p: (0, 0, i))],
            out_specs=pl.BlockSpec((out_f, 8, bc), lambda i, p: (0, 0, i)),
        ),
        compiler_params=pltpu.CompilerParams(
            dimension_semantics=("parallel",)),
        cost_estimate=pl.CostEstimate(
            flops=flops, transcendentals=0, bytes_accessed=bytes_accessed),
    )(p_flat, x_packed)


def evolate_forward_packed(x_packed, p_flat, *, block_batch=32768):
    """Packed-layout entry point: callers that keep the (3, 8, R) layout avoid
    the standard wrapper's pad/transpose HBM round trips entirely."""
    rows = 8 * x_packed.shape[-1]
    assert rows % _LANE_PACK == 0, "packed rows must be a multiple of 1024"
    bm_pref, _ = _select_tile(rows, block_batch)
    # Largest 1024-multiple tile <= the preferred tile that divides the rows
    # (padding is not possible for an already-packed input).
    bm = _LANE_PACK
    for d in range(1, bm_pref // _LANE_PACK + 1):
        if rows % (d * _LANE_PACK) == 0:
            bm = d * _LANE_PACK
    return _pallas_packed_forward(x_packed, p_flat, bm)


def evolate_forward(x, params, *, block_batch=32768, use_kernel=None):
    """x: (B, 3) float32 -> (B, 4). params: dict w1..w5 (out,in), b1..b5 (out,)."""
    B, in_dim = x.shape
    assert in_dim == _DIMS[0][0]
    if use_kernel is None:
        use_kernel = B >= _SMALL_BATCH
    if not use_kernel:
        # Small-batch fast path: launch + repack overheads dominate the
        # ~0.1 ns/row of kernel compute, so plain fused XLA wins here.
        return reference_forward(x.astype(jnp.float32), params)
    bm, rows_padded = _select_tile(B, block_batch)
    x_packed = pack_input(x, rows_padded)
    out_packed = _pallas_packed_forward(x_packed, pack_params(params), bm)
    return unpack_output(out_packed, B)


def init_params(key):
    """Deterministic init mimicking nn.Linear (PyTorch (out,in) convention)."""
    params = {}
    for idx, (fan_in, fan_out) in enumerate(_DIMS, start=1):
        key, kw, kb = jax.random.split(key, 3)
        bound = fan_in ** -0.5
        params[f"w{idx}"] = jax.random.uniform(
            kw, (fan_out, fan_in), jnp.float32, -bound, bound)
        params[f"b{idx}"] = jax.random.uniform(
            kb, (fan_out,), jnp.float32, -bound, bound)
    return params


def reference_forward(x, params):
    h = x
    for i in range(1, 6):
        w, b = params[f"w{i}"], params[f"b{i}"]
        h = jnp.dot(h, w.T, precision=jax.lax.Precision.HIGHEST) + b
        if i < 5:
            h = jnp.maximum(h, 0.0)
    return h


if __name__ == "__main__":
    key = jax.random.PRNGKey(0)
    kx1, kx2, kp = jax.random.split(key, 3)
    params = init_params(kp)

    # 1) Small batch, not a multiple of the tile: padding path, single grid
    #    step, single-chunk inner path.  Force the Pallas kernel (the auto
    #    heuristic would otherwise route this to the jnp fast path).
    x_small = jax.random.normal(kx1, (19, 3), jnp.float32)
    out_small = jax.block_until_ready(
        evolate_forward(x_small, params, use_kernel=True))
    ref_small = reference_forward(x_small, params)
    assert out_small.shape == (19, 4)
    assert jnp.allclose(out_small, ref_small, atol=1e-5, rtol=1e-5)

    # 2) Larger batch: multi-step "parallel" grid (>= 2 steps for v7x) and a
    #    multi-chunk inner loop; uses the default (kernel) dispatch path.
    x_big = jax.random.normal(kx2, (9001, 3), jnp.float32)
    out_big = jax.block_until_ready(evolate_forward(x_big, params))
    ref_big = reference_forward(x_big, params)
    assert out_big.shape == (9001, 4)
    assert jnp.allclose(out_big, ref_big, atol=1e-5, rtol=1e-5)

    # 3) Packed-layout entry point (no wrapper pad/transpose HBM passes).
    bm, rows_padded = _select_tile(x_big.shape[0], 32768)
    out_packed = jax.block_until_ready(
        evolate_forward_packed(pack_input(x_big, rows_padded),
                               pack_params(params)))
    assert jnp.allclose(unpack_output(out_packed, x_big.shape[0]), ref_big,
                        atol=1e-5, rtol=1e-5)

    print("KERNEL_OK")
</pallas_src>

<mosaic_0001>
module attributes {stable_mosaic.version = 11 : i64} {
  func.func @_mlp_kernel(%arg0: i32, %arg1: memref<234xf32, #tpu.memory_space<smem>>, %arg2: memref<3x8x128xf32, #tpu.memory_space<vmem>>, %arg3: memref<4x8x128xf32, #tpu.memory_space<vmem>>) attributes {dimension_semantics = [#tpu.dimension_semantics<parallel>], iteration_bounds = array<i64: 1>, scalar_prefetch = 1 : i64, scratch_operands = 0 : i64, tpu.core_type = #tpu.core_type<tc>, window_params = [{transform_indices = @transform_0, window_bounds = array<i64: 3, 8, 128>}, {transform_indices = @transform_1, window_bounds = array<i64: 4, 8, 128>}]} {
    %c0 = arith.constant 0 : index
    %0 = memref.load %arg1[%c0] : memref<234xf32, #tpu.memory_space<smem>>
    %c1 = arith.constant 1 : index
    %1 = memref.load %arg1[%c1] : memref<234xf32, #tpu.memory_space<smem>>
    %c2 = arith.constant 2 : index
    %2 = memref.load %arg1[%c2] : memref<234xf32, #tpu.memory_space<smem>>
    %c3 = arith.constant 3 : index
    %3 = memref.load %arg1[%c3] : memref<234xf32, #tpu.memory_space<smem>>
    %c4 = arith.constant 4 : index
    %4 = memref.load %arg1[%c4] : memref<234xf32, #tpu.memory_space<smem>>
    %c5 = arith.constant 5 : index
    %5 = memref.load %arg1[%c5] : memref<234xf32, #tpu.memory_space<smem>>
    %c6 = arith.constant 6 : index
    %6 = memref.load %arg1[%c6] : memref<234xf32, #tpu.memory_space<smem>>
    %c7 = arith.constant 7 : index
    %7 = memref.load %arg1[%c7] : memref<234xf32, #tpu.memory_space<smem>>
    %c8 = arith.constant 8 : index
    %8 = memref.load %arg1[%c8] : memref<234xf32, #tpu.memory_space<smem>>
    %c9 = arith.constant 9 : index
    %9 = memref.load %arg1[%c9] : memref<234xf32, #tpu.memory_space<smem>>
    %c10 = arith.constant 10 : index
    %10 = memref.load %arg1[%c10] : memref<234xf32, #tpu.memory_space<smem>>
    %c11 = arith.constant 11 : index
    %11 = memref.load %arg1[%c11] : memref<234xf32, #tpu.memory_space<smem>>
    %c12 = arith.constant 12 : index
    %12 = memref.load %arg1[%c12] : memref<234xf32, #tpu.memory_space<smem>>
    %c13 = arith.constant 13 : index
    %13 = memref.load %arg1[%c13] : memref<234xf32, #tpu.memory_space<smem>>
    %c14 = arith.constant 14 : index
    %14 = memref.load %arg1[%c14] : memref<234xf32, #tpu.memory_space<smem>>
    %c15 = arith.constant 15 : index
    %15 = memref.load %arg1[%c15] : memref<234xf32, #tpu.memory_space<smem>>
    %c16 = arith.constant 16 : index
    %16 = memref.load %arg1[%c16] : memref<234xf32, #tpu.memory_space<smem>>
    %c17 = arith.constant 17 : index
    %17 = memref.load %arg1[%c17] : memref<234xf32, #tpu.memory_space<smem>>
    %c202 = arith.constant 202 : index
    %18 = memref.load %arg1[%c202] : memref<234xf32, #tpu.memory_space<smem>>
    %c203 = arith.constant 203 : index
    %19 = memref.load %arg1[%c203] : memref<234xf32, #tpu.memory_space<smem>>
    %c204 = arith.constant 204 : index
    %20 = memref.load %arg1[%c204] : memref<234xf32, #tpu.memory_space<smem>>
    %c205 = arith.constant 205 : index
    %21 = memref.load %arg1[%c205] : memref<234xf32, #tpu.memory_space<smem>>
    %c206 = arith.constant 206 : index
    %22 = memref.load %arg1[%c206] : memref<234xf32, #tpu.memory_space<smem>>
    %c207 = arith.constant 207 : index
    %23 = memref.load %arg1[%c207] : memref<234xf32, #tpu.memory_space<smem>>
    %c18 = arith.constant 18 : index
    %24 = memref.load %arg1[%c18] : memref<234xf32, #tpu.memory_space<smem>>
    %c19 = arith.constant 19 : index
    %25 = memref.load %arg1[%c19] : memref<234xf32, #tpu.memory_space<smem>>
    %c20 = arith.constant 20 : index
    %26 = memref.load %arg1[%c20] : memref<234xf32, #tpu.memory_space<smem>>
    %c21 = arith.constant 21 : index
    %27 = memref.load %arg1[%c21] : memref<234xf32, #tpu.memory_space<smem>>
    %c22 = arith.constant 22 : index
    %28 = memref.load %arg1[%c22] : memref<234xf32, #tpu.memory_space<smem>>
    %c23 = arith.constant 23 : index
    %29 = memref.load %arg1[%c23] : memref<234xf32, #tpu.memory_space<smem>>
    %c24 = arith.constant 24 : index
    %30 = memref.load %arg1[%c24] : memref<234xf32, #tpu.memory_space<smem>>
    %c25 = arith.constant 25 : index
    %31 = memref.load %arg1[%c25] : memref<234xf32, #tpu.memory_space<smem>>
    %c26 = arith.constant 26 : index
    %32 = memref.load %arg1[%c26] : memref<234xf32, #tpu.memory_space<smem>>
    %c27 = arith.constant 27 : index
    %33 = memref.load %arg1[%c27] : memref<234xf32, #tpu.memory_space<smem>>
    %c28 = arith.constant 28 : index
    %34 = memref.load %arg1[%c28] : memref<234xf32, #tpu.memory_space<smem>>
    %c29 = arith.constant 29 : index
    %35 = memref.load %arg1[%c29] : memref<234xf32, #tpu.memory_space<smem>>
    %c30 = arith.constant 30 : index
    %36 = memref.load %arg1[%c30] : memref<234xf32, #tpu.memory_space<smem>>
    %c31 = arith.constant 31 : index
    %37 = memref.load %arg1[%c31] : memref<234xf32, #tpu.memory_space<smem>>
    %c32 = arith.constant 32 : index
    %38 = memref.load %arg1[%c32] : memref<234xf32, #tpu.memory_space<smem>>
    %c33 = arith.constant 33 : index
    %39 = memref.load %arg1[%c33] : memref<234xf32, #tpu.memory_space<smem>>
    %c34 = arith.constant 34 : index
    %40 = memref.load %arg1[%c34] : memref<234xf32, #tpu.memory_space<smem>>
    %c35 = arith.constant 35 : index
    %41 = memref.load %arg1[%c35] : memref<234xf32, #tpu.memory_space<smem>>
    %c36 = arith.constant 36 : index
    %42 = memref.load %arg1[%c36] : memref<234xf32, #tpu.memory_space<smem>>
    %c37 = arith.constant 37 : index
    %43 = memref.load %arg1[%c37] : memref<234xf32, #tpu.memory_space<smem>>
    %c38 = arith.constant 38 : index
    %44 = memref.load %arg1[%c38] : memref<234xf32, #tpu.memory_space<smem>>
    %c39 = arith.constant 39 : index
    %45 = memref.load %arg1[%c39] : memref<234xf32, #tpu.memory_space<smem>>
    %c40 = arith.constant 40 : index
    %46 = memref.load %arg1[%c40] : memref<234xf32, #tpu.memory_space<smem>>
    %c41 = arith.constant 41 : index
    %47 = memref.load %arg1[%c41] : memref<234xf32, #tpu.memory_space<smem>>
    %c42 = arith.constant 42 : index
    %48 = memref.load %arg1[%c42] : memref<234xf32, #tpu.memory_space<smem>>
    %c43 = arith.constant 43 : index
    %49 = memref.load %arg1[%c43] : memref<234xf32, #tpu.memory_space<smem>>
    %c44 = arith.constant 44 : index
    %50 = memref.load %arg1[%c44] : memref<234xf32, #tpu.memory_space<smem>>
    %c45 = arith.constant 45 : index
    %51 = memref.load %arg1[%c45] : memref<234xf32, #tpu.memory_space<smem>>
    %c46 = arith.constant 46 : index
    %52 = memref.load %arg1[%c46] : memref<234xf32, #tpu.memory_space<smem>>
    %c47 = arith.constant 47 : index
    %53 = memref.load %arg1[%c47] : memref<234xf32, #tpu.memory_space<smem>>
    %c48 = arith.constant 48 : index
    %54 = memref.load %arg1[%c48] : memref<234xf32, #tpu.memory_space<smem>>
    %c49 = arith.constant 49 : index
    %55 = memref.load %arg1[%c49] : memref<234xf32, #tpu.memory_space<smem>>
    %c50 = arith.constant 50 : index
    %56 = memref.load %arg1[%c50] : memref<234xf32, #tpu.memory_space<smem>>
    %c51 = arith.constant 51 : index
    %57 = memref.load %arg1[%c51] : memref<234xf32, #tpu.memory_space<smem>>
    %c52 = arith.constant 52 : index
    %58 = memref.load %arg1[%c52] : memref<234xf32, #tpu.memory_space<smem>>
    %c53 = arith.constant 53 : index
    %59 = memref.load %arg1[%c53] : memref<234xf32, #tpu.memory_space<smem>>
    %c54 = arith.constant 54 : index
    %60 = memref.load %arg1[%c54] : memref<234xf32, #tpu.memory_space<smem>>
    %c55 = arith.constant 55 : index
    %61 = memref.load %arg1[%c55] : memref<234xf32, #tpu.memory_space<smem>>
    %c56 = arith.constant 56 : index
    %62 = memref.load %arg1[%c56] : memref<234xf32, #tpu.memory_space<smem>>
    %c57 = arith.constant 57 : index
    %63 = memref.load %arg1[%c57] : memref<234xf32, #tpu.memory_space<smem>>
    %c58 = arith.constant 58 : index
    %64 = memref.load %arg1[%c58] : memref<234xf32, #tpu.memory_space<smem>>
    %c59 = arith.constant 59 : index
    %65 = memref.load %arg1[%c59] : memref<234xf32, #tpu.memory_space<smem>>
    %c60 = arith.constant 60 : index
    %66 = memref.load %arg1[%c60] : memref<234xf32, #tpu.memory_space<smem>>
    %c61 = arith.constant 61 : index
    %67 = memref.load %arg1[%c61] : memref<234xf32, #tpu.memory_space<smem>>
    %c62 = arith.constant 62 : index
    %68 = memref.load %arg1[%c62] : memref<234xf32, #tpu.memory_space<smem>>
    %c63 = arith.constant 63 : index
    %69 = memref.load %arg1[%c63] : memref<234xf32, #tpu.memory_space<smem>>
    %c64 = arith.constant 64 : index
    %70 = memref.load %arg1[%c64] : memref<234xf32, #tpu.memory_space<smem>>
    %c65 = arith.constant 65 : index
    %71 = memref.load %arg1[%c65] : memref<234xf32, #tpu.memory_space<smem>>
    %c208 = arith.constant 208 : index
    %72 = memref.load %arg1[%c208] : memref<234xf32, #tpu.memory_space<smem>>
    %c209 = arith.constant 209 : index
    %73 = memref.load %arg1[%c209] : memref<234xf32, #tpu.memory_space<smem>>
    %c210 = arith.constant 210 : index
    %74 = memref.load %arg1[%c210] : memref<234xf32, #tpu.memory_space<smem>>
    %c211 = arith.constant 211 : index
    %75 = memref.load %arg1[%c211] : memref<234xf32, #tpu.memory_space<smem>>
    %c212 = arith.constant 212 : index
    %76 = memref.load %arg1[%c212] : memref<234xf32, #tpu.memory_space<smem>>
    %c213 = arith.constant 213 : index
    %77 = memref.load %arg1[%c213] : memref<234xf32, #tpu.memory_space<smem>>
    %c214 = arith.constant 214 : index
    %78 = memref.load %arg1[%c214] : memref<234xf32, #tpu.memory_space<smem>>
    %c215 = arith.constant 215 : index
    %79 = memref.load %arg1[%c215] : memref<234xf32, #tpu.memory_space<smem>>
    %c66 = arith.constant 66 : index
    %80 = memref.load %arg1[%c66] : memref<234xf32, #tpu.memory_space<smem>>
    %c67 = arith.constant 67 : index
    %81 = memref.load %arg1[%c67] : memref<234xf32, #tpu.memory_space<smem>>
    %c68 = arith.constant 68 : index
    %82 = memref.load %arg1[%c68] : memref<234xf32, #tpu.memory_space<smem>>
    %c69 = arith.constant 69 : index
    %83 = memref.load %arg1[%c69] : memref<234xf32, #tpu.memory_space<smem>>
    %c70 = arith.constant 70 : index
    %84 = memref.load %arg1[%c70] : memref<234xf32, #tpu.memory_space<smem>>
    %c71 = arith.constant 71 : index
    %85 = memref.load %arg1[%c71] : memref<234xf32, #tpu.memory_space<smem>>
    %c72 = arith.constant 72 : index
    %86 = memref.load %arg1[%c72] : memref<234xf32, #tpu.memory_space<smem>>
    %c73 = arith.constant 73 : index
    %87 = memref.load %arg1[%c73] : memref<234xf32, #tpu.memory_space<smem>>
    %c74 = arith.constant 74 : index
    %88 = memref.load %arg1[%c74] : memref<234xf32, #tpu.memory_space<smem>>
    %c75 = arith.constant 75 : index
    %89 = memref.load %arg1[%c75] : memref<234xf32, #tpu.memory_space<smem>>
    %c76 = arith.constant 76 : index
    %90 = memref.load %arg1[%c76] : memref<234xf32, #tpu.memory_space<smem>>
    %c77 = arith.constant 77 : index
    %91 = memref.load %arg1[%c77] : memref<234xf32, #tpu.memory_space<smem>>
    %c78 = arith.constant 78 : index
    %92 = memref.load %arg1[%c78] : memref<234xf32, #tpu.memory_space<smem>>
    %c79 = arith.constant 79 : index
    %93 = memref.load %arg1[%c79] : memref<234xf32, #tpu.memory_space<smem>>
    %c80 = arith.constant 80 : index
    %94 = memref.load %arg1[%c80] : memref<234xf32, #tpu.memory_space<smem>>
    %c81 = arith.constant 81 : index
    %95 = memref.load %arg1[%c81] : memref<234xf32, #tpu.memory_space<smem>>
    %c82 = arith.constant 82 : index
    %96 = memref.load %arg1[%c82] : memref<234xf32, #tpu.memory_space<smem>>
    %c83 = arith.constant 83 : index
    %97 = memref.load %arg1[%c83] : memref<234xf32, #tpu.memory_space<smem>>
    %c84 = arith.constant 84 : index
    %98 = memref.load %arg1[%c84] : memref<234xf32, #tpu.memory_space<smem>>
    %c85 = arith.constant 85 : index
    %99 = memref.load %arg1[%c85] : memref<234xf32, #tpu.memory_space<smem>>
    %c86 = arith.constant 86 : index
    %100 = memref.load %arg1[%c86] : memref<234xf32, #tpu.memory_space<smem>>
    %c87 = arith.constant 87 : index
    %101 = memref.load %arg1[%c87] : memref<234xf32, #tpu.memory_space<smem>>
    %c88 = arith.constant 88 : index
    %102 = memref.load %arg1[%c88] : memref<234xf32, #tpu.memory_space<smem>>
    %c89 = arith.constant 89 : index
    %103 = memref.load %arg1[%c89] : memref<234xf32, #tpu.memory_space<smem>>
    %c90 = arith.constant 90 : index
    %104 = memref.load %arg1[%c90] : memref<234xf32, #tpu.memory_space<smem>>
    %c91 = arith.constant 91 : index
    %105 = memref.load %arg1[%c91] : memref<234xf32, #tpu.memory_space<smem>>
    %c92 = arith.constant 92 : index
    %106 = memref.load %arg1[%c92] : memref<234xf32, #tpu.memory_space<smem>>
    %c93 = arith.constant 93 : index
    %107 = memref.load %arg1[%c93] : memref<234xf32, #tpu.memory_space<smem>>
    %c94 = arith.constant 94 : index
    %108 = memref.load %arg1[%c94] : memref<234xf32, #tpu.memory_space<smem>>
    %c95 = arith.constant 95 : index
    %109 = memref.load %arg1[%c95] : memref<234xf32, #tpu.memory_space<smem>>
    %c96 = arith.constant 96 : index
    %110 = memref.load %arg1[%c96] : memref<234xf32, #tpu.memory_space<smem>>
    %c97 = arith.constant 97 : index
    %111 = memref.load %arg1[%c97] : memref<234xf32, #tpu.memory_space<smem>>
    %c98 = arith.constant 98 : index
    %112 = memref.load %arg1[%c98] : memref<234xf32, #tpu.memory_space<smem>>
    %c99 = arith.constant 99 : index
    %113 = memref.load %arg1[%c99] : memref<234xf32, #tpu.memory_space<smem>>
    %c100 = arith.constant 100 : index
    %114 = memref.load %arg1[%c100] : memref<234xf32, #tpu.memory_space<smem>>
    %c101 = arith.constant 101 : index
    %115 = memref.load %arg1[%c101] : memref<234xf32, #tpu.memory_space<smem>>
    %c102 = arith.constant 102 : index
    %116 = memref.load %arg1[%c102] : memref<234xf32, #tpu.memory_space<smem>>
    %c103 = arith.constant 103 : index
    %117 = memref.load %arg1[%c103] : memref<234xf32, #tpu.memory_space<smem>>
    %c104 = arith.constant 104 : index
    %118 = memref.load %arg1[%c104] : memref<234xf32, #tpu.memory_space<smem>>
    %c105 = arith.constant 105 : index
    %119 = memref.load %arg1[%c105] : memref<234xf32, #tpu.memory_space<smem>>
    %c106 = arith.constant 106 : index
    %120 = memref.load %arg1[%c106] : memref<234xf32, #tpu.memory_space<smem>>
    %c107 = arith.constant 107 : index
    %121 = memref.load %arg1[%c107] : memref<234xf32, #tpu.memory_space<smem>>
    %c108 = arith.constant 108 : index
    %122 = memref.load %arg1[%c108] : memref<234xf32, #tpu.memory_space<smem>>
    %c109 = arith.constant 109 : index
    %123 = memref.load %arg1[%c109] : memref<234xf32, #tpu.memory_space<smem>>
    %c110 = arith.constant 110 : index
    %124 = memref.load %arg1[%c110] : memref<234xf32, #tpu.memory_space<smem>>
    %c111 = arith.constant 111 : index
    %125 = memref.load %arg1[%c111] : memref<234xf32, #tpu.memory_space<smem>>
    %c112 = arith.constant 112 : index
    %126 = memref.load %arg1[%c112] : memref<234xf32, #tpu.memory_space<smem>>
    %c113 = arith.constant 113 : index
    %127 = memref.load %arg1[%c113] : memref<234xf32, #tpu.memory_space<smem>>
    %c114 = arith.constant 114 : index
    %128 = memref.load %arg1[%c114] : memref<234xf32, #tpu.memory_space<smem>>
    %c115 = arith.constant 115 : index
    %129 = memref.load %arg1[%c115] : memref<234xf32, #tpu.memory_space<smem>>
    %c116 = arith.constant 116 : index
    %130 = memref.load %arg1[%c116] : memref<234xf32, #tpu.memory_space<smem>>
    %c117 = arith.constant 117 : index
    %131 = memref.load %arg1[%c117] : memref<234xf32, #tpu.memory_space<smem>>
    %c118 = arith.constant 118 : index
    %132 = memref.load %arg1[%c118] : memref<234xf32, #tpu.memory_space<smem>>
    %c119 = arith.constant 119 : index
    %133 = memref.load %arg1[%c119] : memref<234xf32, #tpu.memory_space<smem>>
    %c120 = arith.constant 120 : index
    %134 = memref.load %arg1[%c120] : memref<234xf32, #tpu.memory_space<smem>>
    %c121 = arith.constant 121 : index
    %135 = memref.load %arg1[%c121] : memref<234xf32, #tpu.memory_space<smem>>
    %c122 = arith.constant 122 : index
    %136 = memref.load %arg1[%c122] : memref<234xf32, #tpu.memory_space<smem>>
    %c123 = arith.constant 123 : index
    %137 = memref.load %arg1[%c123] : memref<234xf32, #tpu.memory_space<smem>>
    %c124 = arith.constant 124 : index
    %138 = memref.load %arg1[%c124] : memref<234xf32, #tpu.memory_space<smem>>
    %c125 = arith.constant 125 : index
    %139 = memref.load %arg1[%c125] : memref<234xf32, #tpu.memory_space<smem>>
    %c126 = arith.constant 126 : index
    %140 = memref.load %arg1[%c126] : memref<234xf32, #tpu.memory_space<smem>>
    %c127 = arith.constant 127 : index
    %141 = memref.load %arg1[%c127] : memref<234xf32, #tpu.memory_space<smem>>
    %c128 = arith.constant 128 : index
    %142 = memref.load %arg1[%c128] : memref<234xf32, #tpu.memory_space<smem>>
    %c129 = arith.constant 129 : index
    %143 = memref.load %arg1[%c129] : memref<234xf32, #tpu.memory_space<smem>>
    %c216 = arith.constant 216 : index
    %144 = memref.load %arg1[%c216] : memref<234xf32, #tpu.memory_space<smem>>
    %c217 = arith.constant 217 : index
    %145 = memref.load %arg1[%c217] : memref<234xf32, #tpu.memory_space<smem>>
    %c218 = arith.constant 218 : index
    %146 = memref.load %arg1[%c218] : memref<234xf32, #tpu.memory_space<smem>>
    %c219 = arith.constant 219 : index
    %147 = memref.load %arg1[%c219] : memref<234xf32, #tpu.memory_space<smem>>
    %c220 = arith.constant 220 : index
    %148 = memref.load %arg1[%c220] : memref<234xf32, #tpu.memory_space<smem>>
    %c221 = arith.constant 221 : index
    %149 = memref.load %arg1[%c221] : memref<234xf32, #tpu.memory_space<smem>>
    %c222 = arith.constant 222 : index
    %150 = memref.load %arg1[%c222] : memref<234xf32, #tpu.memory_space<smem>>
    %c223 = arith.constant 223 : index
    %151 = memref.load %arg1[%c223] : memref<234xf32, #tpu.memory_space<smem>>
    %c130 = arith.constant 130 : index
    %152 = memref.load %arg1[%c130] : memref<234xf32, #tpu.memory_space<smem>>
    %c131 = arith.constant 131 : index
    %153 = memref.load %arg1[%c131] : memref<234xf32, #tpu.memory_space<smem>>
    %c132 = arith.constant 132 : index
    %154 = memref.load %arg1[%c132] : memref<234xf32, #tpu.memory_space<smem>>
    %c133 = arith.constant 133 : index
    %155 = memref.load %arg1[%c133] : memref<234xf32, #tpu.memory_space<smem>>
    %c134 = arith.constant 134 : index
    %156 = memref.load %arg1[%c134] : memref<234xf32, #tpu.memory_space<smem>>
    %c135 = arith.constant 135 : index
    %157 = memref.load %arg1[%c135] : memref<234xf32, #tpu.memory_space<smem>>
    %c136 = arith.constant 136 : index
    %158 = memref.load %arg1[%c136] : memref<234xf32, #tpu.memory_space<smem>>
    %c137 = arith.constant 137 : index
    %159 = memref.load %arg1[%c137] : memref<234xf32, #tpu.memory_space<smem>>
    %c138 = arith.constant 138 : index
    %160 = memref.load %arg1[%c138] : memref<234xf32, #tpu.memory_space<smem>>
    %c139 = arith.constant 139 : index
    %161 = memref.load %arg1[%c139] : memref<234xf32, #tpu.memory_space<smem>>
    %c140 = arith.constant 140 : index
    %162 = memref.load %arg1[%c140] : memref<234xf32, #tpu.memory_space<smem>>
    %c141 = arith.constant 141 : index
    %163 = memref.load %arg1[%c141] : memref<234xf32, #tpu.memory_space<smem>>
    %c142 = arith.constant 142 : index
    %164 = memref.load %arg1[%c142] : memref<234xf32, #tpu.memory_space<smem>>
    %c143 = arith.constant 143 : index
    %165 = memref.load %arg1[%c143] : memref<234xf32, #tpu.memory_space<smem>>
    %c144 = arith.constant 144 : index
    %166 = memref.load %arg1[%c144] : memref<234xf32, #tpu.memory_space<smem>>
    %c145 = arith.constant 145 : index
    %167 = memref.load %arg1[%c145] : memref<234xf32, #tpu.memory_space<smem>>
    %c146 = arith.constant 146 : index
    %168 = memref.load %arg1[%c146] : memref<234xf32, #tpu.memory_space<smem>>
    %c147 = arith.constant 147 : index
    %169 = memref.load %arg1[%c147] : memref<234xf32, #tpu.memory_space<smem>>
    %c148 = arith.constant 148 : index
    %170 = memref.load %arg1[%c148] : memref<234xf32, #tpu.memory_space<smem>>
    %c149 = arith.constant 149 : index
    %171 = memref.load %arg1[%c149] : memref<234xf32, #tpu.memory_space<smem>>
    %c150 = arith.constant 150 : index
    %172 = memref.load %arg1[%c150] : memref<234xf32, #tpu.memory_space<smem>>
    %c151 = arith.constant 151 : index
    %173 = memref.load %arg1[%c151] : memref<234xf32, #tpu.memory_space<smem>>
    %c152 = arith.constant 152 : index
    %174 = memref.load %arg1[%c152] : memref<234xf32, #tpu.memory_space<smem>>
    %c153 = arith.constant 153 : index
    %175 = memref.load %arg1[%c153] : memref<234xf32, #tpu.memory_space<smem>>
    %c154 = arith.constant 154 : index
    %176 = memref.load %arg1[%c154] : memref<234xf32, #tpu.memory_space<smem>>
    %c155 = arith.constant 155 : index
    %177 = memref.load %arg1[%c155] : memref<234xf32, #tpu.memory_space<smem>>
    %c156 = arith.constant 156 : index
    %178 = memref.load %arg1[%c156] : memref<234xf32, #tpu.memory_space<smem>>
    %c157 = arith.constant 157 : index
    %179 = memref.load %arg1[%c157] : memref<234xf32, #tpu.memory_space<smem>>
    %c158 = arith.constant 158 : index
    %180 = memref.load %arg1[%c158] : memref<234xf32, #tpu.memory_space<smem>>
    %c159 = arith.constant 159 : index
    %181 = memref.load %arg1[%c159] : memref<234xf32, #tpu.memory_space<smem>>
    %c160 = arith.constant 160 : index
    %182 = memref.load %arg1[%c160] : memref<234xf32, #tpu.memory_space<smem>>
    %c161 = arith.constant 161 : index
    %183 = memref.load %arg1[%c161] : memref<234xf32, #tpu.memory_space<smem>>
    %c162 = arith.constant 162 : index
    %184 = memref.load %arg1[%c162] : memref<234xf32, #tpu.memory_space<smem>>
    %c163 = arith.constant 163 : index
    %185 = memref.load %arg1[%c163] : memref<234xf32, #tpu.memory_space<smem>>
    %c164 = arith.constant 164 : index
    %186 = memref.load %arg1[%c164] : memref<234xf32, #tpu.memory_space<smem>>
    %c165 = arith.constant 165 : index
    %187 = memref.load %arg1[%c165] : memref<234xf32, #tpu.memory_space<smem>>
    %c166 = arith.constant 166 : index
    %188 = memref.load %arg1[%c166] : memref<234xf32, #tpu.memory_space<smem>>
    %c167 = arith.constant 167 : index
    %189 = memref.load %arg1[%c167] : memref<234xf32, #tpu.memory_space<smem>>
    %c168 = arith.constant 168 : index
    %190 = memref.load %arg1[%c168] : memref<234xf32, #tpu.memory_space<smem>>
    %c169 = arith.constant 169 : index
    %191 = memref.load %arg1[%c169] : memref<234xf32, #tpu.memory_space<smem>>
    %c170 = arith.constant 170 : index
    %192 = memref.load %arg1[%c170] : memref<234xf32, #tpu.memory_space<smem>>
    %c171 = arith.constant 171 : index
    %193 = memref.load %arg1[%c171] : memref<234xf32, #tpu.memory_space<smem>>
    %c172 = arith.constant 172 : index
    %194 = memref.load %arg1[%c172] : memref<234xf32, #tpu.memory_space<smem>>
    %c173 = arith.constant 173 : index
    %195 = memref.load %arg1[%c173] : memref<234xf32, #tpu.memory_space<smem>>
    %c174 = arith.constant 174 : index
    %196 = memref.load %arg1[%c174] : memref<234xf32, #tpu.memory_space<smem>>
    %c175 = arith.constant 175 : index
    %197 = memref.load %arg1[%c175] : memref<234xf32, #tpu.memory_space<smem>>
    %c176 = arith.constant 176 : index
    %198 = memref.load %arg1[%c176] : memref<234xf32, #tpu.memory_space<smem>>
    %c177 = arith.constant 177 : index
    %199 = memref.load %arg1[%c177] : memref<234xf32, #tpu.memory_space<smem>>
    %c224 = arith.constant 224 : index
    %200 = memref.load %arg1[%c224] : memref<234xf32, #tpu.memory_space<smem>>
    %c225 = arith.constant 225 : index
    %201 = memref.load %arg1[%c225] : memref<234xf32, #tpu.memory_space<smem>>
    %c226 = arith.constant 226 : index
    %202 = memref.load %arg1[%c226] : memref<234xf32, #tpu.memory_space<smem>>
    %c227 = arith.constant 227 : index
    %203 = memref.load %arg1[%c227] : memref<234xf32, #tpu.memory_space<smem>>
    %c228 = arith.constant 228 : index
    %204 = memref.load %arg1[%c228] : memref<234xf32, #tpu.memory_space<smem>>
    %c229 = arith.constant 229 : index
    %205 = memref.load %arg1[%c229] : memref<234xf32, #tpu.memory_space<smem>>
    %c178 = arith.constant 178 : index
    %206 = memref.load %arg1[%c178] : memref<234xf32, #tpu.memory_space<smem>>
    %c179 = arith.constant 179 : index
    %207 = memref.load %arg1[%c179] : memref<234xf32, #tpu.memory_space<smem>>
    %c180 = arith.constant 180 : index
    %208 = memref.load %arg1[%c180] : memref<234xf32, #tpu.memory_space<smem>>
    %c181 = arith.constant 181 : index
    %209 = memref.load %arg1[%c181] : memref<234xf32, #tpu.memory_space<smem>>
    %c182 = arith.constant 182 : index
    %210 = memref.load %arg1[%c182] : memref<234xf32, #tpu.memory_space<smem>>
    %c183 = arith.constant 183 : index
    %211 = memref.load %arg1[%c183] : memref<234xf32, #tpu.memory_space<smem>>
    %c184 = arith.constant 184 : index
    %212 = memref.load %arg1[%c184] : memref<234xf32, #tpu.memory_space<smem>>
    %c185 = arith.constant 185 : index
    %213 = memref.load %arg1[%c185] : memref<234xf32, #tpu.memory_space<smem>>
    %c186 = arith.constant 186 : index
    %214 = memref.load %arg1[%c186] : memref<234xf32, #tpu.memory_space<smem>>
    %c187 = arith.constant 187 : index
    %215 = memref.load %arg1[%c187] : memref<234xf32, #tpu.memory_space<smem>>
    %c188 = arith.constant 188 : index
    %216 = memref.load %arg1[%c188] : memref<234xf32, #tpu.memory_space<smem>>
    %c189 = arith.constant 189 : index
    %217 = memref.load %arg1[%c189] : memref<234xf32, #tpu.memory_space<smem>>
    %c190 = arith.constant 190 : index
    %218 = memref.load %arg1[%c190] : memref<234xf32, #tpu.memory_space<smem>>
    %c191 = arith.constant 191 : index
    %219 = memref.load %arg1[%c191] : memref<234xf32, #tpu.memory_space<smem>>
    %c192 = arith.constant 192 : index
    %220 = memref.load %arg1[%c192] : memref<234xf32, #tpu.memory_space<smem>>
    %c193 = arith.constant 193 : index
    %221 = memref.load %arg1[%c193] : memref<234xf32, #tpu.memory_space<smem>>
    %c194 = arith.constant 194 : index
    %222 = memref.load %arg1[%c194] : memref<234xf32, #tpu.memory_space<smem>>
    %c195 = arith.constant 195 : index
    %223 = memref.load %arg1[%c195] : memref<234xf32, #tpu.memory_space<smem>>
    %c196 = arith.constant 196 : index
    %224 = memref.load %arg1[%c196] : memref<234xf32, #tpu.memory_space<smem>>
    %c197 = arith.constant 197 : index
    %225 = memref.load %arg1[%c197] : memref<234xf32, #tpu.memory_space<smem>>
    %c198 = arith.constant 198 : index
    %226 = memref.load %arg1[%c198] : memref<234xf32, #tpu.memory_space<smem>>
    %c199 = arith.constant 199 : index
    %227 = memref.load %arg1[%c199] : memref<234xf32, #tpu.memory_space<smem>>
    %c200 = arith.constant 200 : index
    %228 = memref.load %arg1[%c200] : memref<234xf32, #tpu.memory_space<smem>>
    %c201 = arith.constant 201 : index
    %229 = memref.load %arg1[%c201] : memref<234xf32, #tpu.memory_space<smem>>
    %c230 = arith.constant 230 : index
    %230 = memref.load %arg1[%c230] : memref<234xf32, #tpu.memory_space<smem>>
    %c231 = arith.constant 231 : index
    %231 = memref.load %arg1[%c231] : memref<234xf32, #tpu.memory_space<smem>>
    %c232 = arith.constant 232 : index
    %232 = memref.load %arg1[%c232] : memref<234xf32, #tpu.memory_space<smem>>
    %c233 = arith.constant 233 : index
    %233 = memref.load %arg1[%c233] : memref<234xf32, #tpu.memory_space<smem>>
    %c0_0 = arith.constant 0 : index
    %c0_1 = arith.constant 0 : index
    %c0_2 = arith.constant 0 : index
    %234 = vector.load %arg2[%c0_0, %c0_1, %c0_2] : memref<3x8x128xf32, #tpu.memory_space<vmem>>, vector<1x8x128xf32>
    %235 = vector.shape_cast %234 : vector<1x8x128xf32> to vector<8x128xf32>
    %c1_3 = arith.constant 1 : index
    %c0_4 = arith.constant 0 : index
    %c0_5 = arith.constant 0 : index
    %236 = vector.load %arg2[%c1_3, %c0_4, %c0_5] : memref<3x8x128xf32, #tpu.memory_space<vmem>>, vector<1x8x128xf32>
    %237 = vector.shape_cast %236 : vector<1x8x128xf32> to vector<8x128xf32>
    %c2_6 = arith.constant 2 : index
    %c0_7 = arith.constant 0 : index
    %c0_8 = arith.constant 0 : index
    %238 = vector.load %arg2[%c2_6, %c0_7, %c0_8] : memref<3x8x128xf32, #tpu.memory_space<vmem>>, vector<1x8x128xf32>
    %239 = vector.shape_cast %238 : vector<1x8x128xf32> to vector<8x128xf32>
    %240 = vector.broadcast %0 : f32 to vector<8x128xf32>
    %241 = arith.mulf %235, %240 : vector<8x128xf32>
    %242 = vector.broadcast %1 : f32 to vector<8x128xf32>
    %243 = arith.mulf %237, %242 : vector<8x128xf32>
    %244 = arith.addf %241, %243 : vector<8x128xf32>
    %245 = vector.broadcast %2 : f32 to vector<8x128xf32>
    %246 = arith.mulf %239, %245 : vector<8x128xf32>
    %247 = arith.addf %244, %246 : vector<8x128xf32>
    %248 = vector.broadcast %18 : f32 to vector<8x128xf32>
    %249 = arith.addf %247, %248 : vector<8x128xf32>
    %cst = arith.constant 0.000000e+00 : f32
    %250 = vector.broadcast %cst : f32 to vector<8x128xf32>
    %251 = arith.maximumf %249, %250 : vector<8x128xf32>
    %252 = vector.broadcast %3 : f32 to vector<8x128xf32>
    %253 = arith.mulf %235, %252 : vector<8x128xf32>
    %254 = vector.broadcast %4 : f32 to vector<8x128xf32>
    %255 = arith.mulf %237, %254 : vector<8x128xf32>
    %256 = arith.addf %253, %255 : vector<8x128xf32>
    %257 = vector.broadcast %5 : f32 to vector<8x128xf32>
    %258 = arith.mulf %239, %257 : vector<8x128xf32>
    %259 = arith.addf %256, %258 : vector<8x128xf32>
    %260 = vector.broadcast %19 : f32 to vector<8x128xf32>
    %261 = arith.addf %259, %260 : vector<8x128xf32>
    %cst_9 = arith.constant 0.000000e+00 : f32
    %262 = vector.broadcast %cst_9 : f32 to vector<8x128xf32>
    %263 = arith.maximumf %261, %262 : vector<8x128xf32>
    %264 = vector.broadcast %6 : f32 to vector<8x128xf32>
    %265 = arith.mulf %235, %264 : vector<8x128xf32>
    %266 = vector.broadcast %7 : f32 to vector<8x128xf32>
    %267 = arith.mulf %237, %266 : vector<8x128xf32>
    %268 = arith.addf %265, %267 : vector<8x128xf32>
    %269 = vector.broadcast %8 : f32 to vector<8x128xf32>
    %270 = arith.mulf %239, %269 : vector<8x128xf32>
    %271 = arith.addf %268, %270 : vector<8x128xf32>
    %272 = vector.broadcast %20 : f32 to vector<8x128xf32>
    %273 = arith.addf %271, %272 : vector<8x128xf32>
    %cst_10 = arith.constant 0.000000e+00 : f32
    %274 = vector.broadcast %cst_10 : f32 to vector<8x128xf32>
    %275 = arith.maximumf %273, %274 : vector<8x128xf32>
    %276 = vector.broadcast %9 : f32 to vector<8x128xf32>
    %277 = arith.mulf %235, %276 : vector<8x128xf32>
    %278 = vector.broadcast %10 : f32 to vector<8x128xf32>
    %279 = arith.mulf %237, %278 : vector<8x128xf32>
    %280 = arith.addf %277, %279 : vector<8x128xf32>
    %281 = vector.broadcast %11 : f32 to vector<8x128xf32>
    %282 = arith.mulf %239, %281 : vector<8x128xf32>
    %283 = arith.addf %280, %282 : vector<8x128xf32>
    %284 = vector.broadcast %21 : f32 to vector<8x128xf32>
    %285 = arith.addf %283, %284 : vector<8x128xf32>
    %cst_11 = arith.constant 0.000000e+00 : f32
    %286 = vector.broadcast %cst_11 : f32 to vector<8x128xf32>
    %287 = arith.maximumf %285, %286 : vector<8x128xf32>
    %288 = vector.broadcast %12 : f32 to vector<8x128xf32>
    %289 = arith.mulf %235, %288 : vector<8x128xf32>
    %290 = vector.broadcast %13 : f32 to vector<8x128xf32>
    %291 = arith.mulf %237, %290 : vector<8x128xf32>
    %292 = arith.addf %289, %291 : vector<8x128xf32>
    %293 = vector.broadcast %14 : f32 to vector<8x128xf32>
    %294 = arith.mulf %239, %293 : vector<8x128xf32>
    %295 = arith.addf %292, %294 : vector<8x128xf32>
    %296 = vector.broadcast %22 : f32 to vector<8x128xf32>
    %297 = arith.addf %295, %296 : vector<8x128xf32>
    %cst_12 = arith.constant 0.000000e+00 : f32
    %298 = vector.broadcast %cst_12 : f32 to vector<8x128xf32>
    %299 = arith.maximumf %297, %298 : vector<8x128xf32>
    %300 = vector.broadcast %15 : f32 to vector<8x128xf32>
    %301 = arith.mulf %235, %300 : vector<8x128xf32>
    %302 = vector.broadcast %16 : f32 to vector<8x128xf32>
    %303 = arith.mulf %237, %302 : vector<8x128xf32>
    %304 = arith.addf %301, %303 : vector<8x128xf32>
    %305 = vector.broadcast %17 : f32 to vector<8x128xf32>
    %306 = arith.mulf %239, %305 : vector<8x128xf32>
    %307 = arith.addf %304, %306 : vector<8x128xf32>
    %308 = vector.broadcast %23 : f32 to vector<8x128xf32>
    %309 = arith.addf %307, %308 : vector<8x128xf32>
    %cst_13 = arith.constant 0.000000e+00 : f32
    %310 = vector.broadcast %cst_13 : f32 to vector<8x128xf32>
    %311 = arith.maximumf %309, %310 : vector<8x128xf32>
    %312 = vector.broadcast %24 : f32 to vector<8x128xf32>
    %313 = arith.mulf %251, %312 : vector<8x128xf32>
    %314 = vector.broadcast %25 : f32 to vector<8x128xf32>
    %315 = arith.mulf %263, %314 : vector<8x128xf32>
    %316 = arith.addf %313, %315 : vector<8x128xf32>
    %317 = vector.broadcast %26 : f32 to vector<8x128xf32>
    %318 = arith.mulf %275, %317 : vector<8x128xf32>
    %319 = arith.addf %316, %318 : vector<8x128xf32>
    %320 = vector.broadcast %27 : f32 to vector<8x128xf32>
    %321 = arith.mulf %287, %320 : vector<8x128xf32>
    %322 = arith.addf %319, %321 : vector<8x128xf32>
    %323 = vector.broadcast %28 : f32 to vector<8x128xf32>
    %324 = arith.mulf %299, %323 : vector<8x128xf32>
    %325 = arith.addf %322, %324 : vector<8x128xf32>
    %326 = vector.broadcast %29 : f32 to vector<8x128xf32>
    %327 = arith.mulf %311, %326 : vector<8x128xf32>
    %328 = arith.addf %325, %327 : vector<8x128xf32>
    %329 = vector.broadcast %72 : f32 to vector<8x128xf32>
    %330 = arith.addf %328, %329 : vector<8x128xf32>
    %cst_14 = arith.constant 0.000000e+00 : f32
    %331 = vector.broadcast %cst_14 : f32 to vector<8x128xf32>
    %332 = arith.maximumf %330, %331 : vector<8x128xf32>
    %333 = vector.broadcast %30 : f32 to vector<8x128xf32>
    %334 = arith.mulf %251, %333 : vector<8x128xf32>
    %335 = vector.broadcast %31 : f32 to vector<8x128xf32>
    %336 = arith.mulf %263, %335 : vector<8x128xf32>
    %337 = arith.addf %334, %336 : vector<8x128xf32>
    %338 = vector.broadcast %32 : f32 to vector<8x128xf32>
    %339 = arith.mulf %275, %338 : vector<8x128xf32>
    %340 = arith.addf %337, %339 : vector<8x128xf32>
    %341 = vector.broadcast %33 : f32 to vector<8x128xf32>
    %342 = arith.mulf %287, %341 : vector<8x128xf32>
    %343 = arith.addf %340, %342 : vector<8x128xf32>
    %344 = vector.broadcast %34 : f32 to vector<8x128xf32>
    %345 = arith.mulf %299, %344 : vector<8x128xf32>
    %346 = arith.addf %343, %345 : vector<8x128xf32>
    %347 = vector.broadcast %35 : f32 to vector<8x128xf32>
    %348 = arith.mulf %311, %347 : vector<8x128xf32>
    %349 = arith.addf %346, %348 : vector<8x128xf32>
    %350 = vector.broadcast %73 : f32 to vector<8x128xf32>
    %351 = arith.addf %349, %350 : vector<8x128xf32>
    %cst_15 = arith.constant 0.000000e+00 : f32
    %352 = vector.broadcast %cst_15 : f32 to vector<8x128xf32>
    %353 = arith.maximumf %351, %352 : vector<8x128xf32>
    %354 = vector.broadcast %36 : f32 to vector<8x128xf32>
    %355 = arith.mulf %251, %354 : vector<8x128xf32>
    %356 = vector.broadcast %37 : f32 to vector<8x128xf32>
    %357 = arith.mulf %263, %356 : vector<8x128xf32>
    %358 = arith.addf %355, %357 : vector<8x128xf32>
    %359 = vector.broadcast %38 : f32 to vector<8x128xf32>
    %360 = arith.mulf %275, %359 : vector<8x128xf32>
    %361 = arith.addf %358, %360 : vector<8x128xf32>
    %362 = vector.broadcast %39 : f32 to vector<8x128xf32>
    %363 = arith.mulf %287, %362 : vector<8x128xf32>
    %364 = arith.addf %361, %363 : vector<8x128xf32>
    %365 = vector.broadcast %40 : f32 to vector<8x128xf32>
    %366 = arith.mulf %299, %365 : vector<8x128xf32>
    %367 = arith.addf %364, %366 : vector<8x128xf32>
    %368 = vector.broadcast %41 : f32 to vector<8x128xf32>
    %369 = arith.mulf %311, %368 : vector<8x128xf32>
    %370 = arith.addf %367, %369 : vector<8x128xf32>
    %371 = vector.broadcast %74 : f32 to vector<8x128xf32>
    %372 = arith.addf %370, %371 : vector<8x128xf32>
    %cst_16 = arith.constant 0.000000e+00 : f32
    %373 = vector.broadcast %cst_16 : f32 to vector<8x128xf32>
    %374 = arith.maximumf %372, %373 : vector<8x128xf32>
    %375 = vector.broadcast %42 : f32 to vector<8x128xf32>
    %376 = arith.mulf %251, %375 : vector<8x128xf32>
    %377 = vector.broadcast %43 : f32 to vector<8x128xf32>
    %378 = arith.mulf %263, %377 : vector<8x128xf32>
    %379 = arith.addf %376, %378 : vector<8x128xf32>
    %380 = vector.broadcast %44 : f32 to vector<8x128xf32>
    %381 = arith.mulf %275, %380 : vector<8x128xf32>
    %382 = arith.addf %379, %381 : vector<8x128xf32>
    %383 = vector.broadcast %45 : f32 to vector<8x128xf32>
    %384 = arith.mulf %287, %383 : vector<8x128xf32>
    %385 = arith.addf %382, %384 : vector<8x128xf32>
    %386 = vector.broadcast %46 : f32 to vector<8x128xf32>
    %387 = arith.mulf %299, %386 : vector<8x128xf32>
    %388 = arith.addf %385, %387 : vector<8x128xf32>
    %389 = vector.broadcast %47 : f32 to vector<8x128xf32>
    %390 = arith.mulf %311, %389 : vector<8x128xf32>
    %391 = arith.addf %388, %390 : vector<8x128xf32>
    %392 = vector.broadcast %75 : f32 to vector<8x128xf32>
    %393 = arith.addf %391, %392 : vector<8x128xf32>
    %cst_17 = arith.constant 0.000000e+00 : f32
    %394 = vector.broadcast %cst_17 : f32 to vector<8x128xf32>
    %395 = arith.maximumf %393, %394 : vector<8x128xf32>
    %396 = vector.broadcast %48 : f32 to vector<8x128xf32>
    %397 = arith.mulf %251, %396 : vector<8x128xf32>
    %398 = vector.broadcast %49 : f32 to vector<8x128xf32>
    %399 = arith.mulf %263, %398 : vector<8x128xf32>
    %400 = arith.addf %397, %399 : vector<8x128xf32>
    %401 = vector.broadcast %50 : f32 to vector<8x128xf32>
    %402 = arith.mulf %275, %401 : vector<8x128xf32>
    %403 = arith.addf %400, %402 : vector<8x128xf32>
    %404 = vector.broadcast %51 : f32 to vector<8x128xf32>
    %405 = arith.mulf %287, %404 : vector<8x128xf32>
    %406 = arith.addf %403, %405 : vector<8x128xf32>
    %407 = vector.broadcast %52 : f32 to vector<8x128xf32>
    %408 = arith.mulf %299, %407 : vector<8x128xf32>
    %409 = arith.addf %406, %408 : vector<8x128xf32>
    %410 = vector.broadcast %53 : f32 to vector<8x128xf32>
    %411 = arith.mulf %311, %410 : vector<8x128xf32>
    %412 = arith.addf %409, %411 : vector<8x128xf32>
    %413 = vector.broadcast %76 : f32 to vector<8x128xf32>
    %414 = arith.addf %412, %413 : vector<8x128xf32>
    %cst_18 = arith.constant 0.000000e+00 : f32
    %415 = vector.broadcast %cst_18 : f32 to vector<8x128xf32>
    %416 = arith.maximumf %414, %415 : vector<8x128xf32>
    %417 = vector.broadcast %54 : f32 to vector<8x128xf32>
    %418 = arith.mulf %251, %417 : vector<8x128xf32>
    %419 = vector.broadcast %55 : f32 to vector<8x128xf32>
    %420 = arith.mulf %263, %419 : vector<8x128xf32>
    %421 = arith.addf %418, %420 : vector<8x128xf32>
    %422 = vector.broadcast %56 : f32 to vector<8x128xf32>
    %423 = arith.mulf %275, %422 : vector<8x128xf32>
    %424 = arith.addf %421, %423 : vector<8x128xf32>
    %425 = vector.broadcast %57 : f32 to vector<8x128xf32>
    %426 = arith.mulf %287, %425 : vector<8x128xf32>
    %427 = arith.addf %424, %426 : vector<8x128xf32>
    %428 = vector.broadcast %58 : f32 to vector<8x128xf32>
    %429 = arith.mulf %299, %428 : vector<8x128xf32>
    %430 = arith.addf %427, %429 : vector<8x128xf32>
    %431 = vector.broadcast %59 : f32 to vector<8x128xf32>
    %432 = arith.mulf %311, %431 : vector<8x128xf32>
    %433 = arith.addf %430, %432 : vector<8x128xf32>
    %434 = vector.broadcast %77 : f32 to vector<8x128xf32>
    %435 = arith.addf %433, %434 : vector<8x128xf32>
    %cst_19 = arith.constant 0.000000e+00 : f32
    %436 = vector.broadcast %cst_19 : f32 to vector<8x128xf32>
    %437 = arith.maximumf %435, %436 : vector<8x128xf32>
    %438 = vector.broadcast %60 : f32 to vector<8x128xf32>
    %439 = arith.mulf %251, %438 : vector<8x128xf32>
    %440 = vector.broadcast %61 : f32 to vector<8x128xf32>
    %441 = arith.mulf %263, %440 : vector<8x128xf32>
    %442 = arith.addf %439, %441 : vector<8x128xf32>
    %443 = vector.broadcast %62 : f32 to vector<8x128xf32>
    %444 = arith.mulf %275, %443 : vector<8x128xf32>
    %445 = arith.addf %442, %444 : vector<8x128xf32>
    %446 = vector.broadcast %63 : f32 to vector<8x128xf32>
    %447 = arith.mulf %287, %446 : vector<8x128xf32>
    %448 = arith.addf %445, %447 : vector<8x128xf32>
    %449 = vector.broadcast %64 : f32 to vector<8x128xf32>
    %450 = arith.mulf %299, %449 : vector<8x128xf32>
    %451 = arith.addf %448, %450 : vector<8x128xf32>
    %452 = vector.broadcast %65 : f32 to vector<8x128xf32>
    %453 = arith.mulf %311, %452 : vector<8x128xf32>
    %454 = arith.addf %451, %453 : vector<8x128xf32>
    %455 = vector.broadcast %78 : f32 to vector<8x128xf32>
    %456 = arith.addf %454, %455 : vector<8x128xf32>
    %cst_20 = arith.constant 0.000000e+00 : f32
    %457 = vector.broadcast %cst_20 : f32 to vector<8x128xf32>
    %458 = arith.maximumf %456, %457 : vector<8x128xf32>
    %459 = vector.broadcast %66 : f32 to vector<8x128xf32>
    %460 = arith.mulf %251, %459 : vector<8x128xf32>
    %461 = vector.broadcast %67 : f32 to vector<8x128xf32>
    %462 = arith.mulf %263, %461 : vector<8x128xf32>
    %463 = arith.addf %460, %462 : vector<8x128xf32>
    %464 = vector.broadcast %68 : f32 to vector<8x128xf32>
    %465 = arith.mulf %275, %464 : vector<8x128xf32>
    %466 = arith.addf %463, %465 : vector<8x128xf32>
    %467 = vector.broadcast %69 : f32 to vector<8x128xf32>
    %468 = arith.mulf %287, %467 : vector<8x128xf32>
    %469 = arith.addf %466, %468 : vector<8x128xf32>
    %470 = vector.broadcast %70 : f32 to vector<8x128xf32>
    %471 = arith.mulf %299, %470 : vector<8x128xf32>
    %472 = arith.addf %469, %471 : vector<8x128xf32>
    %473 = vector.broadcast %71 : f32 to vector<8x128xf32>
    %474 = arith.mulf %311, %473 : vector<8x128xf32>
    %475 = arith.addf %472, %474 : vector<8x128xf32>
    %476 = vector.broadcast %79 : f32 to vector<8x128xf32>
    %477 = arith.addf %475, %476 : vector<8x128xf32>
    %cst_21 = arith.constant 0.000000e+00 : f32
    %478 = vector.broadcast %cst_21 : f32 to vector<8x128xf32>
    %479 = arith.maximumf %477, %478 : vector<8x128xf32>
    %480 = vector.broadcast %80 : f32 to vector<8x128xf32>
    %481 = arith.mulf %332, %480 : vector<8x128xf32>
    %482 = vector.broadcast %81 : f32 to vector<8x128xf32>
    %483 = arith.mulf %353, %482 : vector<8x128xf32>
    %484 = arith.addf %481, %483 : vector<8x128xf32>
    %485 = vector.broadcast %82 : f32 to vector<8x128xf32>
    %486 = arith.mulf %374, %485 : vector<8x128xf32>
    %487 = arith.addf %484, %486 : vector<8x128xf32>
    %488 = vector.broadcast %83 : f32 to vector<8x128xf32>
    %489 = arith.mulf %395, %488 : vector<8x128xf32>
    %490 = arith.addf %487, %489 : vector<8x128xf32>
    %491 = vector.broadcast %84 : f32 to vector<8x128xf32>
    %492 = arith.mulf %416, %491 : vector<8x128xf32>
    %493 = arith.addf %490, %492 : vector<8x128xf32>
    %494 = vector.broadcast %85 : f32 to vector<8x128xf32>
    %495 = arith.mulf %437, %494 : vector<8x128xf32>
    %496 = arith.addf %493, %495 : vector<8x128xf32>
    %497 = vector.broadcast %86 : f32 to vector<8x128xf32>
    %498 = arith.mulf %458, %497 : vector<8x128xf32>
    %499 = arith.addf %496, %498 : vector<8x128xf32>
    %500 = vector.broadcast %87 : f32 to vector<8x128xf32>
    %501 = arith.mulf %479, %500 : vector<8x128xf32>
    %502 = arith.addf %499, %501 : vector<8x128xf32>
    %503 = vector.broadcast %144 : f32 to vector<8x128xf32>
    %504 = arith.addf %502, %503 : vector<8x128xf32>
    %cst_22 = arith.constant 0.000000e+00 : f32
    %505 = vector.broadcast %cst_22 : f32 to vector<8x128xf32>
    %506 = arith.maximumf %504, %505 : vector<8x128xf32>
    %507 = vector.broadcast %88 : f32 to vector<8x128xf32>
    %508 = arith.mulf %332, %507 : vector<8x128xf32>
    %509 = vector.broadcast %89 : f32 to vector<8x128xf32>
    %510 = arith.mulf %353, %509 : vector<8x128xf32>
    %511 = arith.addf %508, %510 : vector<8x128xf32>
    %512 = vector.broadcast %90 : f32 to vector<8x128xf32>
    %513 = arith.mulf %374, %512 : vector<8x128xf32>
    %514 = arith.addf %511, %513 : vector<8x128xf32>
    %515 = vector.broadcast %91 : f32 to vector<8x128xf32>
    %516 = arith.mulf %395, %515 : vector<8x128xf32>
    %517 = arith.addf %514, %516 : vector<8x128xf32>
    %518 = vector.broadcast %92 : f32 to vector<8x128xf32>
    %519 = arith.mulf %416, %518 : vector<8x128xf32>
    %520 = arith.addf %517, %519 : vector<8x128xf32>
    %521 = vector.broadcast %93 : f32 to vector<8x128xf32>
    %522 = arith.mulf %437, %521 : vector<8x128xf32>
    %523 = arith.addf %520, %522 : vector<8x128xf32>
    %524 = vector.broadcast %94 : f32 to vector<8x128xf32>
    %525 = arith.mulf %458, %524 : vector<8x128xf32>
    %526 = arith.addf %523, %525 : vector<8x128xf32>
    %527 = vector.broadcast %95 : f32 to vector<8x128xf32>
    %528 = arith.mulf %479, %527 : vector<8x128xf32>
    %529 = arith.addf %526, %528 : vector<8x128xf32>
    %530 = vector.broadcast %145 : f32 to vector<8x128xf32>
    %531 = arith.addf %529, %530 : vector<8x128xf32>
    %cst_23 = arith.constant 0.000000e+00 : f32
    %532 = vector.broadcast %cst_23 : f32 to vector<8x128xf32>
    %533 = arith.maximumf %531, %532 : vector<8x128xf32>
    %534 = vector.broadcast %96 : f32 to vector<8x128xf32>
    %535 = arith.mulf %332, %534 : vector<8x128xf32>
    %536 = vector.broadcast %97 : f32 to vector<8x128xf32>
    %537 = arith.mulf %353, %536 : vector<8x128xf32>
    %538 = arith.addf %535, %537 : vector<8x128xf32>
    %539 = vector.broadcast %98 : f32 to vector<8x128xf32>
    %540 = arith.mulf %374, %539 : vector<8x128xf32>
    %541 = arith.addf %538, %540 : vector<8x128xf32>
    %542 = vector.broadcast %99 : f32 to vector<8x128xf32>
    %543 = arith.mulf %395, %542 : vector<8x128xf32>
    %544 = arith.addf %541, %543 : vector<8x128xf32>
    %545 = vector.broadcast %100 : f32 to vector<8x128xf32>
    %546 = arith.mulf %416, %545 : vector<8x128xf32>
    %547 = arith.addf %544, %546 : vector<8x128xf32>
    %548 = vector.broadcast %101 : f32 to vector<8x128xf32>
    %549 = arith.mulf %437, %548 : vector<8x128xf32>
    %550 = arith.addf %547, %549 : vector<8x128xf32>
    %551 = vector.broadcast %102 : f32 to vector<8x128xf32>
    %552 = arith.mulf %458, %551 : vector<8x128xf32>
    %553 = arith.addf %550, %552 : vector<8x128xf32>
    %554 = vector.broadcast %103 : f32 to vector<8x128xf32>
    %555 = arith.mulf %479, %554 : vector<8x128xf32>
    %556 = arith.addf %553, %555 : vector<8x128xf32>
    %557 = vector.broadcast %146 : f32 to vector<8x128xf32>
    %558 = arith.addf %556, %557 : vector<8x128xf32>
    %cst_24 = arith.constant 0.000000e+00 : f32
    %559 = vector.broadcast %cst_24 : f32 to vector<8x128xf32>
    %560 = arith.maximumf %558, %559 : vector<8x128xf32>
    %561 = vector.broadcast %104 : f32 to vector<8x128xf32>
    %562 = arith.mulf %332, %561 : vector<8x128xf32>
    %563 = vector.broadcast %105 : f32 to vector<8x128xf32>
    %564 = arith.mulf %353, %563 : vector<8x128xf32>
    %565 = arith.addf %562, %564 : vector<8x128xf32>
    %566 = vector.broadcast %106 : f32 to vector<8x128xf32>
    %567 = arith.mulf %374, %566 : vector<8x128xf32>
    %568 = arith.addf %565, %567 : vector<8x128xf32>
    %569 = vector.broadcast %107 : f32 to vector<8x128xf32>
    %570 = arith.mulf %395, %569 : vector<8x128xf32>
    %571 = arith.addf %568, %570 : vector<8x128xf32>
    %572 = vector.broadcast %108 : f32 to vector<8x128xf32>
    %573 = arith.mulf %416, %572 : vector<8x128xf32>
    %574 = arith.addf %571, %573 : vector<8x128xf32>
    %575 = vector.broadcast %109 : f32 to vector<8x128xf32>
    %576 = arith.mulf %437, %575 : vector<8x128xf32>
    %577 = arith.addf %574, %576 : vector<8x128xf32>
    %578 = vector.broadcast %110 : f32 to vector<8x128xf32>
    %579 = arith.mulf %458, %578 : vector<8x128xf32>
    %580 = arith.addf %577, %579 : vector<8x128xf32>
    %581 = vector.broadcast %111 : f32 to vector<8x128xf32>
    %582 = arith.mulf %479, %581 : vector<8x128xf32>
    %583 = arith.addf %580, %582 : vector<8x128xf32>
    %584 = vector.broadcast %147 : f32 to vector<8x128xf32>
    %585 = arith.addf %583, %584 : vector<8x128xf32>
    %cst_25 = arith.constant 0.000000e+00 : f32
    %586 = vector.broadcast %cst_25 : f32 to vector<8x128xf32>
    %587 = arith.maximumf %585, %586 : vector<8x128xf32>
    %588 = vector.broadcast %112 : f32 to vector<8x128xf32>
    %589 = arith.mulf %332, %588 : vector<8x128xf32>
    %590 = vector.broadcast %113 : f32 to vector<8x128xf32>
    %591 = arith.mulf %353, %590 : vector<8x128xf32>
    %592 = arith.addf %589, %591 : vector<8x128xf32>
    %593 = vector.broadcast %114 : f32 to vector<8x128xf32>
    %594 = arith.mulf %374, %593 : vector<8x128xf32>
    %595 = arith.addf %592, %594 : vector<8x128xf32>
    %596 = vector.broadcast %115 : f32 to vector<8x128xf32>
    %597 = arith.mulf %395, %596 : vector<8x128xf32>
    %598 = arith.addf %595, %597 : vector<8x128xf32>
    %599 = vector.broadcast %116 : f32 to vector<8x128xf32>
    %600 = arith.mulf %416, %599 : vector<8x128xf32>
    %601 = arith.addf %598, %600 : vector<8x128xf32>
    %602 = vector.broadcast %117 : f32 to vector<8x128xf32>
    %603 = arith.mulf %437, %602 : vector<8x128xf32>
    %604 = arith.addf %601, %603 : vector<8x128xf32>
    %605 = vector.broadcast %118 : f32 to vector<8x128xf32>
    %606 = arith.mulf %458, %605 : vector<8x128xf32>
    %607 = arith.addf %604, %606 : vector<8x128xf32>
    %608 = vector.broadcast %119 : f32 to vector<8x128xf32>
    %609 = arith.mulf %479, %608 : vector<8x128xf32>
    %610 = arith.addf %607, %609 : vector<8x128xf32>
    %611 = vector.broadcast %148 : f32 to vector<8x128xf32>
    %612 = arith.addf %610, %611 : vector<8x128xf32>
    %cst_26 = arith.constant 0.000000e+00 : f32
    %613 = vector.broadcast %cst_26 : f32 to vector<8x128xf32>
    %614 = arith.maximumf %612, %613 : vector<8x128xf32>
    %615 = vector.broadcast %120 : f32 to vector<8x128xf32>
    %616 = arith.mulf %332, %615 : vector<8x128xf32>
    %617 = vector.broadcast %121 : f32 to vector<8x128xf32>
    %618 = arith.mulf %353, %617 : vector<8x128xf32>
    %619 = arith.addf %616, %618 : vector<8x128xf32>
    %620 = vector.broadcast %122 : f32 to vector<8x128xf32>
    %621 = arith.mulf %374, %620 : vector<8x128xf32>
    %622 = arith.addf %619, %621 : vector<8x128xf32>
    %623 = vector.broadcast %123 : f32 to vector<8x128xf32>
    %624 = arith.mulf %395, %623 : vector<8x128xf32>
    %625 = arith.addf %622, %624 : vector<8x128xf32>
    %626 = vector.broadcast %124 : f32 to vector<8x128xf32>
    %627 = arith.mulf %416, %626 : vector<8x128xf32>
    %628 = arith.addf %625, %627 : vector<8x128xf32>
    %629 = vector.broadcast %125 : f32 to vector<8x128xf32>
    %630 = arith.mulf %437, %629 : vector<8x128xf32>
    %631 = arith.addf %628, %630 : vector<8x128xf32>
    %632 = vector.broadcast %126 : f32 to vector<8x128xf32>
    %633 = arith.mulf %458, %632 : vector<8x128xf32>
    %634 = arith.addf %631, %633 : vector<8x128xf32>
    %635 = vector.broadcast %127 : f32 to vector<8x128xf32>
    %636 = arith.mulf %479, %635 : vector<8x128xf32>
    %637 = arith.addf %634, %636 : vector<8x128xf32>
    %638 = vector.broadcast %149 : f32 to vector<8x128xf32>
    %639 = arith.addf %637, %638 : vector<8x128xf32>
    %cst_27 = arith.constant 0.000000e+00 : f32
    %640 = vector.broadcast %cst_27 : f32 to vector<8x128xf32>
    %641 = arith.maximumf %639, %640 : vector<8x128xf32>
    %642 = vector.broadcast %128 : f32 to vector<8x128xf32>
    %643 = arith.mulf %332, %642 : vector<8x128xf32>
    %644 = vector.broadcast %129 : f32 to vector<8x128xf32>
    %645 = arith.mulf %353, %644 : vector<8x128xf32>
    %646 = arith.addf %643, %645 : vector<8x128xf32>
    %647 = vector.broadcast %130 : f32 to vector<8x128xf32>
    %648 = arith.mulf %374, %647 : vector<8x128xf32>
    %649 = arith.addf %646, %648 : vector<8x128xf32>
    %650 = vector.broadcast %131 : f32 to vector<8x128xf32>
    %651 = arith.mulf %395, %650 : vector<8x128xf32>
    %652 = arith.addf %649, %651 : vector<8x128xf32>
    %653 = vector.broadcast %132 : f32 to vector<8x128xf32>
    %654 = arith.mulf %416, %653 : vector<8x128xf32>
    %655 = arith.addf %652, %654 : vector<8x128xf32>
    %656 = vector.broadcast %133 : f32 to vector<8x128xf32>
    %657 = arith.mulf %437, %656 : vector<8x128xf32>
    %658 = arith.addf %655, %657 : vector<8x128xf32>
    %659 = vector.broadcast %134 : f32 to vector<8x128xf32>
    %660 = arith.mulf %458, %659 : vector<8x128xf32>
    %661 = arith.addf %658, %660 : vector<8x128xf32>
    %662 = vector.broadcast %135 : f32 to vector<8x128xf32>
    %663 = arith.mulf %479, %662 : vector<8x128xf32>
    %664 = arith.addf %661, %663 : vector<8x128xf32>
    %665 = vector.broadcast %150 : f32 to vector<8x128xf32>
    %666 = arith.addf %664, %665 : vector<8x128xf32>
    %cst_28 = arith.constant 0.000000e+00 : f32
    %667 = vector.broadcast %cst_28 : f32 to vector<8x128xf32>
    %668 = arith.maximumf %666, %667 : vector<8x128xf32>
    %669 = vector.broadcast %136 : f32 to vector<8x128xf32>
    %670 = arith.mulf %332, %669 : vector<8x128xf32>
    %671 = vector.broadcast %137 : f32 to vector<8x128xf32>
    %672 = arith.mulf %353, %671 : vector<8x128xf32>
    %673 = arith.addf %670, %672 : vector<8x128xf32>
    %674 = vector.broadcast %138 : f32 to vector<8x128xf32>
    %675 = arith.mulf %374, %674 : vector<8x128xf32>
    %676 = arith.addf %673, %675 : vector<8x128xf32>
    %677 = vector.broadcast %139 : f32 to vector<8x128xf32>
    %678 = arith.mulf %395, %677 : vector<8x128xf32>
    %679 = arith.addf %676, %678 : vector<8x128xf32>
    %680 = vector.broadcast %140 : f32 to vector<8x128xf32>
    %681 = arith.mulf %416, %680 : vector<8x128xf32>
    %682 = arith.addf %679, %681 : vector<8x128xf32>
    %683 = vector.broadcast %141 : f32 to vector<8x128xf32>
    %684 = arith.mulf %437, %683 : vector<8x128xf32>
    %685 = arith.addf %682, %684 : vector<8x128xf32>
    %686 = vector.broadcast %142 : f32 to vector<8x128xf32>
    %687 = arith.mulf %458, %686 : vector<8x128xf32>
    %688 = arith.addf %685, %687 : vector<8x128xf32>
    %689 = vector.broadcast %143 : f32 to vector<8x128xf32>
    %690 = arith.mulf %479, %689 : vector<8x128xf32>
    %691 = arith.addf %688, %690 : vector<8x128xf32>
    %692 = vector.broadcast %151 : f32 to vector<8x128xf32>
    %693 = arith.addf %691, %692 : vector<8x128xf32>
    %cst_29 = arith.constant 0.000000e+00 : f32
    %694 = vector.broadcast %cst_29 : f32 to vector<8x128xf32>
    %695 = arith.maximumf %693, %694 : vector<8x128xf32>
    %696 = vector.broadcast %152 : f32 to vector<8x128xf32>
    %697 = arith.mulf %506, %696 : vector<8x128xf32>
    %698 = vector.broadcast %153 : f32 to vector<8x128xf32>
    %699 = arith.mulf %533, %698 : vector<8x128xf32>
    %700 = arith.addf %697, %699 : vector<8x128xf32>
    %701 = vector.broadcast %154 : f32 to vector<8x128xf32>
    %702 = arith.mulf %560, %701 : vector<8x128xf32>
    %703 = arith.addf %700, %702 : vector<8x128xf32>
    %704 = vector.broadcast %155 : f32 to vector<8x128xf32>
    %705 = arith.mulf %587, %704 : vector<8x128xf32>
    %706 = arith.addf %703, %705 : vector<8x128xf32>
    %707 = vector.broadcast %156 : f32 to vector<8x128xf32>
    %708 = arith.mulf %614, %707 : vector<8x128xf32>
    %709 = arith.addf %706, %708 : vector<8x128xf32>
    %710 = vector.broadcast %157 : f32 to vector<8x128xf32>
    %711 = arith.mulf %641, %710 : vector<8x128xf32>
    %712 = arith.addf %709, %711 : vector<8x128xf32>
    %713 = vector.broadcast %158 : f32 to vector<8x128xf32>
    %714 = arith.mulf %668, %713 : vector<8x128xf32>
    %715 = arith.addf %712, %714 : vector<8x128xf32>
    %716 = vector.broadcast %159 : f32 to vector<8x128xf32>
    %717 = arith.mulf %695, %716 : vector<8x128xf32>
    %718 = arith.addf %715, %717 : vector<8x128xf32>
    %719 = vector.broadcast %200 : f32 to vector<8x128xf32>
    %720 = arith.addf %718, %719 : vector<8x128xf32>
    %cst_30 = arith.constant 0.000000e+00 : f32
    %721 = vector.broadcast %cst_30 : f32 to vector<8x128xf32>
    %722 = arith.maximumf %720, %721 : vector<8x128xf32>
    %723 = vector.broadcast %160 : f32 to vector<8x128xf32>
    %724 = arith.mulf %506, %723 : vector<8x128xf32>
    %725 = vector.broadcast %161 : f32 to vector<8x128xf32>
    %726 = arith.mulf %533, %725 : vector<8x128xf32>
    %727 = arith.addf %724, %726 : vector<8x128xf32>
    %728 = vector.broadcast %162 : f32 to vector<8x128xf32>
    %729 = arith.mulf %560, %728 : vector<8x128xf32>
    %730 = arith.addf %727, %729 : vector<8x128xf32>
    %731 = vector.broadcast %163 : f32 to vector<8x128xf32>
    %732 = arith.mulf %587, %731 : vector<8x128xf32>
    %733 = arith.addf %730, %732 : vector<8x128xf32>
    %734 = vector.broadcast %164 : f32 to vector<8x128xf32>
    %735 = arith.mulf %614, %734 : vector<8x128xf32>
    %736 = arith.addf %733, %735 : vector<8x128xf32>
    %737 = vector.broadcast %165 : f32 to vector<8x128xf32>
    %738 = arith.mulf %641, %737 : vector<8x128xf32>
    %739 = arith.addf %736, %738 : vector<8x128xf32>
    %740 = vector.broadcast %166 : f32 to vector<8x128xf32>
    %741 = arith.mulf %668, %740 : vector<8x128xf32>
    %742 = arith.addf %739, %741 : vector<8x128xf32>
    %743 = vector.broadcast %167 : f32 to vector<8x128xf32>
    %744 = arith.mulf %695, %743 : vector<8x128xf32>
    %745 = arith.addf %742, %744 : vector<8x128xf32>
    %746 = vector.broadcast %201 : f32 to vector<8x128xf32>
    %747 = arith.addf %745, %746 : vector<8x128xf32>
    %cst_31 = arith.constant 0.000000e+00 : f32
    %748 = vector.broadcast %cst_31 : f32 to vector<8x128xf32>
    %749 = arith.maximumf %747, %748 : vector<8x128xf32>
    %750 = vector.broadcast %168 : f32 to vector<8x128xf32>
    %751 = arith.mulf %506, %750 : vector<8x128xf32>
    %752 = vector.broadcast %169 : f32 to vector<8x128xf32>
    %753 = arith.mulf %533, %752 : vector<8x128xf32>
    %754 = arith.addf %751, %753 : vector<8x128xf32>
    %755 = vector.broadcast %170 : f32 to vector<8x128xf32>
    %756 = arith.mulf %560, %755 : vector<8x128xf32>
    %757 = arith.addf %754, %756 : vector<8x128xf32>
    %758 = vector.broadcast %171 : f32 to vector<8x128xf32>
    %759 = arith.mulf %587, %758 : vector<8x128xf32>
    %760 = arith.addf %757, %759 : vector<8x128xf32>
    %761 = vector.broadcast %172 : f32 to vector<8x128xf32>
    %762 = arith.mulf %614, %761 : vector<8x128xf32>
    %763 = arith.addf %760, %762 : vector<8x128xf32>
    %764 = vector.broadcast %173 : f32 to vector<8x128xf32>
    %765 = arith.mulf %641, %764 : vector<8x128xf32>
    %766 = arith.addf %763, %765 : vector<8x128xf32>
    %767 = vector.broadcast %174 : f32 to vector<8x128xf32>
    %768 = arith.mulf %668, %767 : vector<8x128xf32>
    %769 = arith.addf %766, %768 : vector<8x128xf32>
    %770 = vector.broadcast %175 : f32 to vector<8x128xf32>
    %771 = arith.mulf %695, %770 : vector<8x128xf32>
    %772 = arith.addf %769, %771 : vector<8x128xf32>
    %773 = vector.broadcast %202 : f32 to vector<8x128xf32>
    %774 = arith.addf %772, %773 : vector<8x128xf32>
    %cst_32 = arith.constant 0.000000e+00 : f32
    %775 = vector.broadcast %cst_32 : f32 to vector<8x128xf32>
    %776 = arith.maximumf %774, %775 : vector<8x128xf32>
    %777 = vector.broadcast %176 : f32 to vector<8x128xf32>
    %778 = arith.mulf %506, %777 : vector<8x128xf32>
    %779 = vector.broadcast %177 : f32 to vector<8x128xf32>
    %780 = arith.mulf %533, %779 : vector<8x128xf32>
    %781 = arith.addf %778, %780 : vector<8x128xf32>
    %782 = vector.broadcast %178 : f32 to vector<8x128xf32>
    %783 = arith.mulf %560, %782 : vector<8x128xf32>
    %784 = arith.addf %781, %783 : vector<8x128xf32>
    %785 = vector.broadcast %179 : f32 to vector<8x128xf32>
    %786 = arith.mulf %587, %785 : vector<8x128xf32>
    %787 = arith.addf %784, %786 : vector<8x128xf32>
    %788 = vector.broadcast %180 : f32 to vector<8x128xf32>
    %789 = arith.mulf %614, %788 : vector<8x128xf32>
    %790 = arith.addf %787, %789 : vector<8x128xf32>
    %791 = vector.broadcast %181 : f32 to vector<8x128xf32>
    %792 = arith.mulf %641, %791 : vector<8x128xf32>
    %793 = arith.addf %790, %792 : vector<8x128xf32>
    %794 = vector.broadcast %182 : f32 to vector<8x128xf32>
    %795 = arith.mulf %668, %794 : vector<8x128xf32>
    %796 = arith.addf %793, %795 : vector<8x128xf32>
    %797 = vector.broadcast %183 : f32 to vector<8x128xf32>
    %798 = arith.mulf %695, %797 : vector<8x128xf32>
    %799 = arith.addf %796, %798 : vector<8x128xf32>
    %800 = vector.broadcast %203 : f32 to vector<8x128xf32>
    %801 = arith.addf %799, %800 : vector<8x128xf32>
    %cst_33 = arith.constant 0.000000e+00 : f32
    %802 = vector.broadcast %cst_33 : f32 to vector<8x128xf32>
    %803 = arith.maximumf %801, %802 : vector<8x128xf32>
    %804 = vector.broadcast %184 : f32 to vector<8x128xf32>
    %805 = arith.mulf %506, %804 : vector<8x128xf32>
    %806 = vector.broadcast %185 : f32 to vector<8x128xf32>
    %807 = arith.mulf %533, %806 : vector<8x128xf32>
    %808 = arith.addf %805, %807 : vector<8x128xf32>
    %809 = vector.broadcast %186 : f32 to vector<8x128xf32>
    %810 = arith.mulf %560, %809 : vector<8x128xf32>
    %811 = arith.addf %808, %810 : vector<8x128xf32>
    %812 = vector.broadcast %187 : f32 to vector<8x128xf32>
    %813 = arith.mulf %587, %812 : vector<8x128xf32>
    %814 = arith.addf %811, %813 : vector<8x128xf32>
    %815 = vector.broadcast %188 : f32 to vector<8x128xf32>
    %816 = arith.mulf %614, %815 : vector<8x128xf32>
    %817 = arith.addf %814, %816 : vector<8x128xf32>
    %818 = vector.broadcast %189 : f32 to vector<8x128xf32>
    %819 = arith.mulf %641, %818 : vector<8x128xf32>
    %820 = arith.addf %817, %819 : vector<8x128xf32>
    %821 = vector.broadcast %190 : f32 to vector<8x128xf32>
    %822 = arith.mulf %668, %821 : vector<8x128xf32>
    %823 = arith.addf %820, %822 : vector<8x128xf32>
    %824 = vector.broadcast %191 : f32 to vector<8x128xf32>
    %825 = arith.mulf %695, %824 : vector<8x128xf32>
    %826 = arith.addf %823, %825 : vector<8x128xf32>
    %827 = vector.broadcast %204 : f32 to vector<8x128xf32>
    %828 = arith.addf %826, %827 : vector<8x128xf32>
    %cst_34 = arith.constant 0.000000e+00 : f32
    %829 = vector.broadcast %cst_34 : f32 to vector<8x128xf32>
    %830 = arith.maximumf %828, %829 : vector<8x128xf32>
    %831 = vector.broadcast %192 : f32 to vector<8x128xf32>
    %832 = arith.mulf %506, %831 : vector<8x128xf32>
    %833 = vector.broadcast %193 : f32 to vector<8x128xf32>
    %834 = arith.mulf %533, %833 : vector<8x128xf32>
    %835 = arith.addf %832, %834 : vector<8x128xf32>
    %836 = vector.broadcast %194 : f32 to vector<8x128xf32>
    %837 = arith.mulf %560, %836 : vector<8x128xf32>
    %838 = arith.addf %835, %837 : vector<8x128xf32>
    %839 = vector.broadcast %195 : f32 to vector<8x128xf32>
    %840 = arith.mulf %587, %839 : vector<8x128xf32>
    %841 = arith.addf %838, %840 : vector<8x128xf32>
    %842 = vector.broadcast %196 : f32 to vector<8x128xf32>
    %843 = arith.mulf %614, %842 : vector<8x128xf32>
    %844 = arith.addf %841, %843 : vector<8x128xf32>
    %845 = vector.broadcast %197 : f32 to vector<8x128xf32>
    %846 = arith.mulf %641, %845 : vector<8x128xf32>
    %847 = arith.addf %844, %846 : vector<8x128xf32>
    %848 = vector.broadcast %198 : f32 to vector<8x128xf32>
    %849 = arith.mulf %668, %848 : vector<8x128xf32>
    %850 = arith.addf %847, %849 : vector<8x128xf32>
    %851 = vector.broadcast %199 : f32 to vector<8x128xf32>
    %852 = arith.mulf %695, %851 : vector<8x128xf32>
    %853 = arith.addf %850, %852 : vector<8x128xf32>
    %854 = vector.broadcast %205 : f32 to vector<8x128xf32>
    %855 = arith.addf %853, %854 : vector<8x128xf32>
    %cst_35 = arith.constant 0.000000e+00 : f32
    %856 = vector.broadcast %cst_35 : f32 to vector<8x128xf32>
    %857 = arith.maximumf %855, %856 : vector<8x128xf32>
    %858 = vector.broadcast %206 : f32 to vector<8x128xf32>
    %859 = arith.mulf %722, %858 : vector<8x128xf32>
    %860 = vector.broadcast %207 : f32 to vector<8x128xf32>
    %861 = arith.mulf %749, %860 : vector<8x128xf32>
    %862 = arith.addf %859, %861 : vector<8x128xf32>
    %863 = vector.broadcast %208 : f32 to vector<8x128xf32>
    %864 = arith.mulf %776, %863 : vector<8x128xf32>
    %865 = arith.addf %862, %864 : vector<8x128xf32>
    %866 = vector.broadcast %209 : f32 to vector<8x128xf32>
    %867 = arith.mulf %803, %866 : vector<8x128xf32>
    %868 = arith.addf %865, %867 : vector<8x128xf32>
    %869 = vector.broadcast %210 : f32 to vector<8x128xf32>
    %870 = arith.mulf %830, %869 : vector<8x128xf32>
    %871 = arith.addf %868, %870 : vector<8x128xf32>
    %872 = vector.broadcast %211 : f32 to vector<8x128xf32>
    %873 = arith.mulf %857, %872 : vector<8x128xf32>
    %874 = arith.addf %871, %873 : vector<8x128xf32>
    %875 = vector.broadcast %230 : f32 to vector<8x128xf32>
    %876 = arith.addf %874, %875 : vector<8x128xf32>
    %877 = vector.broadcast %212 : f32 to vector<8x128xf32>
    %878 = arith.mulf %722, %877 : vector<8x128xf32>
    %879 = vector.broadcast %213 : f32 to vector<8x128xf32>
    %880 = arith.mulf %749, %879 : vector<8x128xf32>
    %881 = arith.addf %878, %880 : vector<8x128xf32>
    %882 = vector.broadcast %214 : f32 to vector<8x128xf32>
    %883 = arith.mulf %776, %882 : vector<8x128xf32>
    %884 = arith.addf %881, %883 : vector<8x128xf32>
    %885 = vector.broadcast %215 : f32 to vector<8x128xf32>
    %886 = arith.mulf %803, %885 : vector<8x128xf32>
    %887 = arith.addf %884, %886 : vector<8x128xf32>
    %888 = vector.broadcast %216 : f32 to vector<8x128xf32>
    %889 = arith.mulf %830, %888 : vector<8x128xf32>
    %890 = arith.addf %887, %889 : vector<8x128xf32>
    %891 = vector.broadcast %217 : f32 to vector<8x128xf32>
    %892 = arith.mulf %857, %891 : vector<8x128xf32>
    %893 = arith.addf %890, %892 : vector<8x128xf32>
    %894 = vector.broadcast %231 : f32 to vector<8x128xf32>
    %895 = arith.addf %893, %894 : vector<8x128xf32>
    %896 = vector.broadcast %218 : f32 to vector<8x128xf32>
    %897 = arith.mulf %722, %896 : vector<8x128xf32>
    %898 = vector.broadcast %219 : f32 to vector<8x128xf32>
    %899 = arith.mulf %749, %898 : vector<8x128xf32>
    %900 = arith.addf %897, %899 : vector<8x128xf32>
    %901 = vector.broadcast %220 : f32 to vector<8x128xf32>
    %902 = arith.mulf %776, %901 : vector<8x128xf32>
    %903 = arith.addf %900, %902 : vector<8x128xf32>
    %904 = vector.broadcast %221 : f32 to vector<8x128xf32>
    %905 = arith.mulf %803, %904 : vector<8x128xf32>
    %906 = arith.addf %903, %905 : vector<8x128xf32>
    %907 = vector.broadcast %222 : f32 to vector<8x128xf32>
    %908 = arith.mulf %830, %907 : vector<8x128xf32>
    %909 = arith.addf %906, %908 : vector<8x128xf32>
    %910 = vector.broadcast %223 : f32 to vector<8x128xf32>
    %911 = arith.mulf %857, %910 : vector<8x128xf32>
    %912 = arith.addf %909, %911 : vector<8x128xf32>
    %913 = vector.broadcast %232 : f32 to vector<8x128xf32>
    %914 = arith.addf %912, %913 : vector<8x128xf32>
    %915 = vector.broadcast %224 : f32 to vector<8x128xf32>
    %916 = arith.mulf %722, %915 : vector<8x128xf32>
    %917 = vector.broadcast %225 : f32 to vector<8x128xf32>
    %918 = arith.mulf %749, %917 : vector<8x128xf32>
    %919 = arith.addf %916, %918 : vector<8x128xf32>
    %920 = vector.broadcast %226 : f32 to vector<8x128xf32>
    %921 = arith.mulf %776, %920 : vector<8x128xf32>
    %922 = arith.addf %919, %921 : vector<8x128xf32>
    %923 = vector.broadcast %227 : f32 to vector<8x128xf32>
    %924 = arith.mulf %803, %923 : vector<8x128xf32>
    %925 = arith.addf %922, %924 : vector<8x128xf32>
    %926 = vector.broadcast %228 : f32 to vector<8x128xf32>
    %927 = arith.mulf %830, %926 : vector<8x128xf32>
    %928 = arith.addf %925, %927 : vector<8x128xf32>
    %929 = vector.broadcast %229 : f32 to vector<8x128xf32>
    %930 = arith.mulf %857, %929 : vector<8x128xf32>
    %931 = arith.addf %928, %930 : vector<8x128xf32>
    %932 = vector.broadcast %233 : f32 to vector<8x128xf32>
    %933 = arith.addf %931, %932 : vector<8x128xf32>
    %c0_36 = arith.constant 0 : index
    %c0_37 = arith.constant 0 : index
    %c0_38 = arith.constant 0 : index
    %934 = vector.load %arg3[%c0_36, %c0_37, %c0_38] : memref<4x8x128xf32, #tpu.memory_space<vmem>>, vector<1x8x128xf32>
    %935 = vector.shape_cast %934 : vector<1x8x128xf32> to vector<8x128xf32>
    %936 = vector.shape_cast %876 : vector<8x128xf32> to vector<1x8x128xf32>
    tpu.vector_store %arg3[%c0_36, %c0_37, %c0_38], %936 {strides = array<i32>} : memref<4x8x128xf32, #tpu.memory_space<vmem>>, vector<1x8x128xf32>,
    %c1_39 = arith.constant 1 : index
    %c0_40 = arith.constant 0 : index
    %c0_41 = arith.constant 0 : index
    %937 = vector.load %arg3[%c1_39, %c0_40, %c0_41] : memref<4x8x128xf32, #tpu.memory_space<vmem>>, vector<1x8x128xf32>
    %938 = vector.shape_cast %937 : vector<1x8x128xf32> to vector<8x128xf32>
    %939 = vector.shape_cast %895 : vector<8x128xf32> to vector<1x8x128xf32>
    tpu.vector_store %arg3[%c1_39, %c0_40, %c0_41], %939 {strides = array<i32>} : memref<4x8x128xf32, #tpu.memory_space<vmem>>, vector<1x8x128xf32>,
    %c2_42 = arith.constant 2 : index
    %c0_43 = arith.constant 0 : index
    %c0_44 = arith.constant 0 : index
    %940 = vector.load %arg3[%c2_42, %c0_43, %c0_44] : memref<4x8x128xf32, #tpu.memory_space<vmem>>, vector<1x8x128xf32>
    %941 = vector.shape_cast %940 : vector<1x8x128xf32> to vector<8x128xf32>
    %942 = vector.shape_cast %914 : vector<8x128xf32> to vector<1x8x128xf32>
    tpu.vector_store %arg3[%c2_42, %c0_43, %c0_44], %942 {strides = array<i32>} : memref<4x8x128xf32, #tpu.memory_space<vmem>>, vector<1x8x128xf32>,
    %c3_45 = arith.constant 3 : index
    %c0_46 = arith.constant 0 : index
    %c0_47 = arith.constant 0 : index
    %943 = vector.load %arg3[%c3_45, %c0_46, %c0_47] : memref<4x8x128xf32, #tpu.memory_space<vmem>>, vector<1x8x128xf32>
    %944 = vector.shape_cast %943 : vector<1x8x128xf32> to vector<8x128xf32>
    %945 = vector.shape_cast %933 : vector<8x128xf32> to vector<1x8x128xf32>
    tpu.vector_store %arg3[%c3_45, %c0_46, %c0_47], %945 {strides = array<i32>} : memref<4x8x128xf32, #tpu.memory_space<vmem>>, vector<1x8x128xf32>,
    return
  }
  func.func @transform_0(%arg0: i32, %arg1: memref<234xf32, #tpu.memory_space<smem>>) -> (i32, i32, i32) {
    %c0_i32 = arith.constant 0 : i32
    %c0_i32_0 = arith.constant 0 : i32
    %c0_i32_1 = arith.constant 0 : i32
    return %c0_i32, %c0_i32_0, %arg0 : i32, i32, i32
  }
  func.func @transform_1(%arg0: i32, %arg1: memref<234xf32, #tpu.memory_space<smem>>) -> (i32, i32, i32) {
    %c0_i32 = arith.constant 0 : i32
    %c0_i32_0 = arith.constant 0 : i32
    %c0_i32_1 = arith.constant 0 : i32
    return %c0_i32, %c0_i32_0, %arg0 : i32, i32, i32
  }
}

</mosaic_0001>

<llo_original>
// kernel: tpu_custom_call.1
$region0: #{tpu_custom_call.1}
  #allocation0 [shape = 'u32[]', space=smem, size = 0x4, offset = 0x4, fixed_abs, tag = 'smem constant byte address 0x4 - core index']
  #allocation1 [shape = 'u32[144,128]{1,0:T(1,128)}', space=vmem, size = 0x12000, scoped, tag = 'internal scratch']
  #allocation2 [shape = 's32[1]{0}', space=sflag, size = 0x4, scoped, tag = 'scoped memory for tpu_custom_call.1']
  #allocation3 [shape = 'u8[1024]{0}', space=smem, size = 0x400, scoped, tag = 'prefetched SMEM operand 0']
  %s0 = inlined_call_operand.hbm [shape: f32[234], index: 0, kind: input, shape index: {}]
  %s1 = inlined_call_operand.hbm [shape: f32[3,8,128], index: 1, kind: input, shape index: {}]
  %s2 = inlined_call_operand.hbm [shape: f32[4,8,128], index: 2, kind: output, shape index: {}]
  %s3 = sld [smem:[#allocation0]]
  $region18: #{tpu_custom_call.1} parent=0
    _
  %s5 = ssub.s32 1, %s3
  %s6 = scalar_select 0, %s5, %s3
  %8 = dma.hbm_to_smem %s0, 32, [#allocation3], [#allocation2]
  %9 = dma.done [#allocation2], 32
  %10 = sfence
  $region1: #{tpu_custom_call.1} parent=0
    #allocation4 [shape = 'u8[12288]{0}', space=vmem, size = 0x3000, scoped, tag = 'input window, operand 1, single buffered']
    #allocation5 [shape = 's32[1]{0}', space=sflag, size = 0x4, scoped, tag = 'scoped memory for tpu_custom_call.1']
    #allocation6 [shape = 's32[1]{0}', space=sflag, size = 0x4, scoped, tag = 'scoped memory for tpu_custom_call.1']
    #allocation7 [shape = 'u8[16384]{0}', space=vmem, size = 0x4000, scoped, tag = 'output window, operand 0, single buffered']
    %11 = vsyncpa [#allocation5], 0
    %12 = vsyncpa [#allocation6], 0
    // Predicated region
    $region2: #{tpu_custom_call.1} parent=1 // pred_check
      _
    $region3: #{tpu_custom_call.1} parent=1 // pred_check_branch
      %14 = sbr.rel (0) target = $region5
    $region4: #{tpu_custom_call.1} parent=1 // pred_region
      %s16 = ssub.s32 384, 384
      %17 = vsyncadd [#allocation5], %s16
      %s18 = sshll.u32 [#allocation4], 4
      %s19 = int_to_ptr.vmem [resolvable:$true] %s18
      %24 = dma.hbm_to_vmem [thread:$0]  %s1, 384, %s19, [#allocation5], 128, 128, 8
    $region5: #{tpu_custom_call.1} parent=1 // pred_fallthru
      _
    // Predicated region
    $region6: #{tpu_custom_call.1} parent=1 // pred_check
      _
    $region7: #{tpu_custom_call.1} parent=1 // pred_check_branch
      %26 = sbr.rel (0) target = $region9
    $region8: #{tpu_custom_call.1} parent=1 // pred_region
      %27 = dma.done [#allocation5], 384
    $region9: #{tpu_custom_call.1} parent=1 // pred_fallthru
      _
    %s28 = sld [smem:[#allocation3]]
    %s29 = sld [smem:[#allocation3 + $0x1]]
    %s30 = sld [smem:[#allocation3 + $0x2]]
    %s31 = sld [smem:[#allocation3 + $0x3]]
    %s32 = sld [smem:[#allocation3 + $0x4]]
    %s33 = sld [smem:[#allocation3 + $0x5]]
    %s34 = sld [smem:[#allocation3 + $0x6]]
    %s35 = sld [smem:[#allocation3 + $0x7]]
    %s36 = sld [smem:[#allocation3 + $0x8]]
    %s37 = sld [smem:[#allocation3 + $0x9]]
    %s38 = sld [smem:[#allocation3 + $0xa]]
    %s39 = sld [smem:[#allocation3 + $0xb]]
    %s40 = sld [smem:[#allocation3 + $0xc]]
    %s41 = sld [smem:[#allocation3 + $0xd]]
    %s42 = sld [smem:[#allocation3 + $0xe]]
    %s43 = sld [smem:[#allocation3 + $0xf]]
    %s44 = sld [smem:[#allocation3 + $0x10]]
    %s45 = sld [smem:[#allocation3 + $0x11]]
    %s46 = sld [smem:[#allocation3 + $0xca]]
    %s47 = sld [smem:[#allocation3 + $0xcb]]
    %s48 = sld [smem:[#allocation3 + $0xcc]]
    %s49 = sld [smem:[#allocation3 + $0xcd]]
    %s50 = sld [smem:[#allocation3 + $0xce]]
    %s51 = sld [smem:[#allocation3 + $0xcf]]
    %s52 = sld [smem:[#allocation3 + $0x12]]
    %s53 = sld [smem:[#allocation3 + $0x13]]
    %s54 = sld [smem:[#allocation3 + $0x14]]
    %s55 = sld [smem:[#allocation3 + $0x15]]
    %s56 = sld [smem:[#allocation3 + $0x16]]
    %s57 = sld [smem:[#allocation3 + $0x17]]
    %s58 = sld [smem:[#allocation3 + $0x18]]
    %s59 = sld [smem:[#allocation3 + $0x19]]
    %s60 = sld [smem:[#allocation3 + $0x1a]]
    %s61 = sld [smem:[#allocation3 + $0x1b]]
    %s62 = sld [smem:[#allocation3 + $0x1c]]
    %s63 = sld [smem:[#allocation3 + $0x1d]]
    %s64 = sld [smem:[#allocation3 + $0x1e]]
    %s65 = sld [smem:[#allocation3 + $0x1f]]
    %s66 = sld [smem:[#allocation3 + $0x20]]
    %s67 = sld [smem:[#allocation3 + $0x21]]
    %s68 = sld [smem:[#allocation3 + $0x22]]
    %s69 = sld [smem:[#allocation3 + $0x23]]
    %s70 = sld [smem:[#allocation3 + $0x24]]
    %s71 = sld [smem:[#allocation3 + $0x25]]
    %s72 = sld [smem:[#allocation3 + $0x26]]
    %s73 = sld [smem:[#allocation3 + $0x27]]
    %s74 = sld [smem:[#allocation3 + $0x28]]
    %s75 = sld [smem:[#allocation3 + $0x29]]
    %s76 = sld [smem:[#allocation3 + $0x2a]]
    %s77 = sld [smem:[#allocation3 + $0x2b]]
    %s78 = sld [smem:[#allocation3 + $0x2c]]
    %s79 = sld [smem:[#allocation3 + $0x2d]]
    %s80 = sld [smem:[#allocation3 + $0x2e]]
    %s81 = sld [smem:[#allocation3 + $0x2f]]
    %s82 = sld [smem:[#allocation3 + $0x30]]
    %s83 = sld [smem:[#allocation3 + $0x31]]
    %s84 = sld [smem:[#allocation3 + $0x32]]
    %s85 = sld [smem:[#allocation3 + $0x33]]
    %s86 = sld [smem:[#allocation3 + $0x34]]
    %s87 = sld [smem:[#allocation3 + $0x35]]
    %s88 = sld [smem:[#allocation3 + $0x36]]
    %s89 = sld [smem:[#allocation3 + $0x37]]
    %s90 = sld [smem:[#allocation3 + $0x38]]
    %s91 = sld [smem:[#allocation3 + $0x39]]
    %s92 = sld [smem:[#allocation3 + $0x3a]]
    %s93 = sld [smem:[#allocation3 + $0x3b]]
    %s94 = sld [smem:[#allocation3 + $0x3c]]
    %s95 = sld [smem:[#allocation3 + $0x3d]]
    %s96 = sld [smem:[#allocation3 + $0x3e]]
    %s97 = sld [smem:[#allocation3 + $0x3f]]
    %s98 = sld [smem:[#allocation3 + $0x40]]
    %s99 = sld [smem:[#allocation3 + $0x41]]
    %s100 = sld [smem:[#allocation3 + $0xd0]]
    %s101 = sld [smem:[#allocation3 + $0xd1]]
    %s102 = sld [smem:[#allocation3 + $0xd2]]
    %s103 = sld [smem:[#allocation3 + $0xd3]]
    %s104 = sld [smem:[#allocation3 + $0xd4]]
    %s105 = sld [smem:[#allocation3 + $0xd5]]
    %s106 = sld [smem:[#allocation3 + $0xd6]]
    %s107 = sld [smem:[#allocation3 + $0xd7]]
    %s108 = sld [smem:[#allocation3 + $0x42]]
    %s109 = sld [smem:[#allocation3 + $0x43]]
    %s110 = sld [smem:[#allocation3 + $0x44]]
    %s111 = sld [smem:[#allocation3 + $0x45]]
    %s112 = sld [smem:[#allocation3 + $0x46]]
    %s113 = sld [smem:[#allocation3 + $0x47]]
    %s114 = sld [smem:[#allocation3 + $0x48]]
    %s115 = sld [smem:[#allocation3 + $0x49]]
    %s116 = sld [smem:[#allocation3 + $0x4a]]
    %s117 = sld [smem:[#allocation3 + $0x4b]]
    %s118 = sld [smem:[#allocation3 + $0x4c]]
    %s119 = sld [smem:[#allocation3 + $0x4d]]
    %s120 = sld [smem:[#allocation3 + $0x4e]]
    %s121 = sld [smem:[#allocation3 + $0x4f]]
    %s122 = sld [smem:[#allocation3 + $0x50]]
    %s123 = sld [smem:[#allocation3 + $0x51]]
    %s124 = sld [smem:[#allocation3 + $0x52]]
    %s125 = sld [smem:[#allocation3 + $0x53]]
    %s126 = sld [smem:[#allocation3 + $0x54]]
    %s127 = sld [smem:[#allocation3 + $0x55]]
    %s128 = sld [smem:[#allocation3 + $0x56]]
    %s129 = sld [smem:[#allocation3 + $0x57]]
    %s130 = sld [smem:[#allocation3 + $0x58]]
    %s131 = sld [smem:[#allocation3 + $0x59]]
    %s132 = sld [smem:[#allocation3 + $0x5a]]
    %s133 = sld [smem:[#allocation3 + $0x5b]]
    %s134 = sld [smem:[#allocation3 + $0x5c]]
    %s135 = sld [smem:[#allocation3 + $0x5d]]
    %s136 = sld [smem:[#allocation3 + $0x5e]]
    %s137 = sld [smem:[#allocation3 + $0x5f]]
    %s138 = sld [smem:[#allocation3 + $0x60]]
    %s139 = sld [smem:[#allocation3 + $0x61]]
    %s140 = sld [smem:[#allocation3 + $0x62]]
    %s141 = sld [smem:[#allocation3 + $0x63]]
    %s142 = sld [smem:[#allocation3 + $0x64]]
    %s143 = sld [smem:[#allocation3 + $0x65]]
    %s144 = sld [smem:[#allocation3 + $0x66]]
    %s145 = sld [smem:[#allocation3 + $0x67]]
    %s146 = sld [smem:[#allocation3 + $0x68]]
    %s147 = sld [smem:[#allocation3 + $0x69]]
    %s148 = sld [smem:[#allocation3 + $0x6a]]
    %s149 = sld [smem:[#allocation3 + $0x6b]]
    %s150 = sld [smem:[#allocation3 + $0x6c]]
    %s151 = sld [smem:[#allocation3 + $0x6d]]
    %s152 = sld [smem:[#allocation3 + $0x6e]]
    %s153 = sld [smem:[#allocation3 + $0x6f]]
    %s154 = sld [smem:[#allocation3 + $0x70]]
    %s155 = sld [smem:[#allocation3 + $0x71]]
    %s156 = sld [smem:[#allocation3 + $0x72]]
    %s157 = sld [smem:[#allocation3 + $0x73]]
    %s158 = sld [smem:[#allocation3 + $0x74]]
    %s159 = sld [smem:[#allocation3 + $0x75]]
    %s160 = sld [smem:[#allocation3 + $0x76]]
    %s161 = sld [smem:[#allocation3 + $0x77]]
    %s162 = sld [smem:[#allocation3 + $0x78]]
    %s163 = sld [smem:[#allocation3 + $0x79]]
    %s164 = sld [smem:[#allocation3 + $0x7a]]
    %s165 = sld [smem:[#allocation3 + $0x7b]]
    %s166 = sld [smem:[#allocation3 + $0x7c]]
    %s167 = sld [smem:[#allocation3 + $0x7d]]
    %s168 = sld [smem:[#allocation3 + $0x7e]]
    %s169 = sld [smem:[#allocation3 + $0x7f]]
    %s170 = sld [smem:[#allocation3 + $0x80]]
    %s171 = sld [smem:[#allocation3 + $0x81]]
    %s172 = sld [smem:[#allocation3 + $0xd8]]
    %s173 = sld [smem:[#allocation3 + $0xd9]]
    %s174 = sld [smem:[#allocation3 + $0xda]]
    %s175 = sld [smem:[#allocation3 + $0xdb]]
    %s176 = sld [smem:[#allocation3 + $0xdc]]
    %s177 = sld [smem:[#allocation3 + $0xdd]]
    %s178 = sld [smem:[#allocation3 + $0xde]]
    %s179 = sld [smem:[#allocation3 + $0xdf]]
    %s180 = sld [smem:[#allocation3 + $0x82]]
    %s181 = sld [smem:[#allocation3 + $0x83]]
    %s182 = sld [smem:[#allocation3 + $0x84]]
    %s183 = sld [smem:[#allocation3 + $0x85]]
    %s184 = sld [smem:[#allocation3 + $0x86]]
    %s185 = sld [smem:[#allocation3 + $0x87]]
    %s186 = sld [smem:[#allocation3 + $0x88]]
    %s187 = sld [smem:[#allocation3 + $0x89]]
    %s188 = sld [smem:[#allocation3 + $0x8a]]
    %s189 = sld [smem:[#allocation3 + $0x8b]]
    %s190 = sld [smem:[#allocation3 + $0x8c]]
    %s191 = sld [smem:[#allocation3 + $0x8d]]
    %s192 = sld [smem:[#allocation3 + $0x8e]]
    %s193 = sld [smem:[#allocation3 + $0x8f]]
    %s194 = sld [smem:[#allocation3 + $0x90]]
    %s195 = sld [smem:[#allocation3 + $0x91]]
    %s196 = sld [smem:[#allocation3 + $0x92]]
    %s197 = sld [smem:[#allocation3 + $0x93]]
    %s198 = sld [smem:[#allocation3 + $0x94]]
    %s199 = sld [smem:[#allocation3 + $0x95]]
    %s200 = sld [smem:[#allocation3 + $0x96]]
    %s201 = sld [smem:[#allocation3 + $0x97]]
    %s202 = sld [smem:[#allocation3 + $0x98]]
    %s203 = sld [smem:[#allocation3 + $0x99]]
    %s204 = sld [smem:[#allocation3 + $0x9a]]
    %s205 = sld [smem:[#allocation3 + $0x9b]]
    %s206 = sld [smem:[#allocation3 + $0x9c]]
    %s207 = sld [smem:[#allocation3 + $0x9d]]
    %s208 = sld [smem:[#allocation3 + $0x9e]]
    %s209 = sld [smem:[#allocation3 + $0x9f]]
    %s210 = sld [smem:[#allocation3 + $0xa0]]
    %s211 = sld [smem:[#allocation3 + $0xa1]]
    %s212 = sld [smem:[#allocation3 + $0xa2]]
    %s213 = sld [smem:[#allocation3 + $0xa3]]
    %s214 = sld [smem:[#allocation3 + $0xa4]]
    %s215 = sld [smem:[#allocation3 + $0xa5]]
    %s216 = sld [smem:[#allocation3 + $0xa6]]
    %s217 = sld [smem:[#allocation3 + $0xa7]]
    %s218 = sld [smem:[#allocation3 + $0xa8]]
    %s219 = sld [smem:[#allocation3 + $0xa9]]
    %s220 = sld [smem:[#allocation3 + $0xaa]]
    %s221 = sld [smem:[#allocation3 + $0xab]]
    %s222 = sld [smem:[#allocation3 + $0xac]]
    %s223 = sld [smem:[#allocation3 + $0xad]]
    %s224 = sld [smem:[#allocation3 + $0xae]]
    %s225 = sld [smem:[#allocation3 + $0xaf]]
    %s226 = sld [smem:[#allocation3 + $0xb0]]
    %s227 = sld [smem:[#allocation3 + $0xb1]]
    %s228 = sld [smem:[#allocation3 + $0xe0]]
    %s229 = sld [smem:[#allocation3 + $0xe1]]
    %s230 = sld [smem:[#allocation3 + $0xe2]]
    %s231 = sld [smem:[#allocation3 + $0xe3]]
    %s232 = sld [smem:[#allocation3 + $0xe4]]
    %s233 = sld [smem:[#allocation3 + $0xe5]]
    %s234 = sld [smem:[#allocation3 + $0xb2]]
    %s235 = sld [smem:[#allocation3 + $0xb3]]
    %s236 = sld [smem:[#allocation3 + $0xb4]]
    %s237 = sld [smem:[#allocation3 + $0xb5]]
    %s238 = sld [smem:[#allocation3 + $0xb6]]
    %s239 = sld [smem:[#allocation3 + $0xb7]]
    %s240 = sld [smem:[#allocation3 + $0xb8]]
    %s241 = sld [smem:[#allocation3 + $0xb9]]
    %s242 = sld [smem:[#allocation3 + $0xba]]
    %s243 = sld [smem:[#allocation3 + $0xbb]]
    %s244 = sld [smem:[#allocation3 + $0xbc]]
    %s245 = sld [smem:[#allocation3 + $0xbd]]
    %s246 = sld [smem:[#allocation3 + $0xbe]]
    %s247 = sld [smem:[#allocation3 + $0xbf]]
    %s248 = sld [smem:[#allocation3 + $0xc0]]
    %s249 = sld [smem:[#allocation3 + $0xc1]]
    %s250 = sld [smem:[#allocation3 + $0xc2]]
    %s251 = sld [smem:[#allocation3 + $0xc3]]
    %s252 = sld [smem:[#allocation3 + $0xc4]]
    %s253 = sld [smem:[#allocation3 + $0xc5]]
    %s254 = sld [smem:[#allocation3 + $0xc6]]
    %s255 = sld [smem:[#allocation3 + $0xc7]]
    %s256 = sld [smem:[#allocation3 + $0xc8]]
    %s257 = sld [smem:[#allocation3 + $0xc9]]
    %s258 = sld [smem:[#allocation3 + $0xe6]]
    %s259 = sld [smem:[#allocation3 + $0xe7]]
    %s260 = sld [smem:[#allocation3 + $0xe8]]
    %s261 = sld [smem:[#allocation3 + $0xe9]]
    %v262 = vld [vmem:[#allocation4] sm:$0xff]
    %s263 = scalar_lea.vmem [#allocation4], 8
    %v264 = vld [vmem:[%s263] sm:$0xff]
    %s265 = scalar_lea.vmem [#allocation4], 16
    %v266 = vld [vmem:[%s265] sm:$0xff]
    %v267 = vstv %s28
    %v268 = vmul.f32 %v262, %v267
    %v269 = vstv %s29
    %v270 = vmul.f32 %v264, %v269
    %v271 = vadd.f32 %v268, %v270
    %v272 = vstv %s30
    %v273 = vmul.f32 %v266, %v272
    %v274 = vadd.f32 %v271, %v273
    %v275 = vstv %s46
    %v276 = vadd.f32 %v274, %v275
    %v277 = vmax.f32 %v276, 0.0
    %v278 = vstv %s31
    %v279 = vmul.f32 %v262, %v278
    %v280 = vstv %s32
    %v281 = vmul.f32 %v264, %v280
    %v282 = vadd.f32 %v279, %v281
    %v283 = vstv %s33
    %v284 = vmul.f32 %v266, %v283
    %v285 = vadd.f32 %v282, %v284
    %v286 = vstv %s47
    %v287 = vadd.f32 %v285, %v286
    %v288 = vmax.f32 %v287, 0.0
    %v289 = vstv %s34
    %v290 = vmul.f32 %v262, %v289
    %v291 = vstv %s35
    %v292 = vmul.f32 %v264, %v291
    %v293 = vadd.f32 %v290, %v292
    %v294 = vstv %s36
    %v295 = vmul.f32 %v266, %v294
    %v296 = vadd.f32 %v293, %v295
    %v297 = vstv %s48
    %v298 = vadd.f32 %v296, %v297
    %v299 = vmax.f32 %v298, 0.0
    %v300 = vstv %s37
    %v301 = vmul.f32 %v262, %v300
    %v302 = vstv %s38
    %v303 = vmul.f32 %v264, %v302
    %v304 = vadd.f32 %v301, %v303
    %v305 = vstv %s39
    %v306 = vmul.f32 %v266, %v305
    %v307 = vadd.f32 %v304, %v306
    %v308 = vstv %s49
    %v309 = vadd.f32 %v307, %v308
    %v310 = vmax.f32 %v309, 0.0
    %v311 = vstv %s40
    %v312 = vmul.f32 %v262, %v311
    %v313 = vstv %s41
    %v314 = vmul.f32 %v264, %v313
    %v315 = vadd.f32 %v312, %v314
    %v316 = vstv %s42
    %v317 = vmul.f32 %v266, %v316
    %v318 = vadd.f32 %v315, %v317
    %v319 = vstv %s50
    %v320 = vadd.f32 %v318, %v319
    %v321 = vmax.f32 %v320, 0.0
    %v322 = vstv %s43
    %v323 = vmul.f32 %v262, %v322
    %v324 = vstv %s44
    %v325 = vmul.f32 %v264, %v324
    %v326 = vadd.f32 %v323, %v325
    %v327 = vstv %s45
    %v328 = vmul.f32 %v266, %v327
    %v329 = vadd.f32 %v326, %v328
    %v330 = vstv %s51
    %v331 = vadd.f32 %v329, %v330
    %v332 = vmax.f32 %v331, 0.0
    %v333 = vstv %s52
    %v334 = vmul.f32 %v277, %v333
    %v335 = vstv %s53
    %v336 = vmul.f32 %v288, %v335
    %v337 = vadd.f32 %v334, %v336
    %v338 = vstv %s54
    %v339 = vmul.f32 %v299, %v338
    %v340 = vadd.f32 %v337, %v339
    %v341 = vstv %s55
    %v342 = vmul.f32 %v310, %v341
    %v343 = vadd.f32 %v340, %v342
    %v344 = vstv %s56
    %v345 = vmul.f32 %v321, %v344
    %v346 = vadd.f32 %v343, %v345
    %v347 = vstv %s57
    %v348 = vmul.f32 %v332, %v347
    %v349 = vadd.f32 %v346, %v348
    %v350 = vstv %s100
    %v351 = vadd.f32 %v349, %v350
    %v352 = vmax.f32 %v351, 0.0
    %v353 = vstv %s58
    %v354 = vmul.f32 %v277, %v353
    %v355 = vstv %s59
    %v356 = vmul.f32 %v288, %v355
    %v357 = vadd.f32 %v354, %v356
    %v358 = vstv %s60
    %v359 = vmul.f32 %v299, %v358
    %v360 = vadd.f32 %v357, %v359
    %v361 = vstv %s61
    %v362 = vmul.f32 %v310, %v361
    %v363 = vadd.f32 %v360, %v362
    %v364 = vstv %s62
    %v365 = vmul.f32 %v321, %v364
    %v366 = vadd.f32 %v363, %v365
    %v367 = vstv %s63
    %v368 = vmul.f32 %v332, %v367
    %v369 = vadd.f32 %v366, %v368
    %v370 = vstv %s101
    %v371 = vadd.f32 %v369, %v370
    %v372 = vmax.f32 %v371, 0.0
    %v373 = vstv %s64
    %v374 = vmul.f32 %v277, %v373
    %v375 = vstv %s65
    %v376 = vmul.f32 %v288, %v375
    %v377 = vadd.f32 %v374, %v376
    %v378 = vstv %s66
    %v379 = vmul.f32 %v299, %v378
    %v380 = vadd.f32 %v377, %v379
    %v381 = vstv %s67
    %v382 = vmul.f32 %v310, %v381
    %v383 = vadd.f32 %v380, %v382
    %v384 = vstv %s68
    %v385 = vmul.f32 %v321, %v384
    %v386 = vadd.f32 %v383, %v385
    %v387 = vstv %s69
    %v388 = vmul.f32 %v332, %v387
    %v389 = vadd.f32 %v386, %v388
    %v390 = vstv %s102
    %v391 = vadd.f32 %v389, %v390
    %v392 = vmax.f32 %v391, 0.0
    %v393 = vstv %s70
    %v394 = vmul.f32 %v277, %v393
    %v395 = vstv %s71
    %v396 = vmul.f32 %v288, %v395
    %v397 = vadd.f32 %v394, %v396
    %v398 = vstv %s72
    %v399 = vmul.f32 %v299, %v398
    %v400 = vadd.f32 %v397, %v399
    %v401 = vstv %s73
    %v402 = vmul.f32 %v310, %v401
    %v403 = vadd.f32 %v400, %v402
    %v404 = vstv %s74
    %v405 = vmul.f32 %v321, %v404
    %v406 = vadd.f32 %v403, %v405
    %v407 = vstv %s75
    %v408 = vmul.f32 %v332, %v407
    %v409 = vadd.f32 %v406, %v408
    %v410 = vstv %s103
    %v411 = vadd.f32 %v409, %v410
    %v412 = vmax.f32 %v411, 0.0
    %v413 = vstv %s76
    %v414 = vmul.f32 %v277, %v413
    %v415 = vstv %s77
    %v416 = vmul.f32 %v288, %v415
    %v417 = vadd.f32 %v414, %v416
    %v418 = vstv %s78
    %v419 = vmul.f32 %v299, %v418
    %v420 = vadd.f32 %v417, %v419
    %v421 = vstv %s79
    %v422 = vmul.f32 %v310, %v421
    %v423 = vadd.f32 %v420, %v422
    %v424 = vstv %s80
    %v425 = vmul.f32 %v321, %v424
    %v426 = vadd.f32 %v423, %v425
    %v427 = vstv %s81
    %v428 = vmul.f32 %v332, %v427
    %v429 = vadd.f32 %v426, %v428
    %v430 = vstv %s104
    %v431 = vadd.f32 %v429, %v430
    %v432 = vmax.f32 %v431, 0.0
    %v433 = vstv %s82
    %v434 = vmul.f32 %v277, %v433
    %v435 = vstv %s83
    %v436 = vmul.f32 %v288, %v435
    %v437 = vadd.f32 %v434, %v436
    %v438 = vstv %s84
    %v439 = vmul.f32 %v299, %v438
    %v440 = vadd.f32 %v437, %v439
    %v441 = vstv %s85
    %v442 = vmul.f32 %v310, %v441
    %v443 = vadd.f32 %v440, %v442
    %v444 = vstv %s86
    %v445 = vmul.f32 %v321, %v444
    %v446 = vadd.f32 %v443, %v445
    %v447 = vstv %s87
    %v448 = vmul.f32 %v332, %v447
    %v449 = vadd.f32 %v446, %v448
    %v450 = vstv %s105
    %v451 = vadd.f32 %v449, %v450
    %v452 = vmax.f32 %v451, 0.0
    %v453 = vstv %s88
    %v454 = vmul.f32 %v277, %v453
    %v455 = vstv %s89
    %v456 = vmul.f32 %v288, %v455
    %v457 = vadd.f32 %v454, %v456
    %v458 = vstv %s90
    %v459 = vmul.f32 %v299, %v458
    %v460 = vadd.f32 %v457, %v459
    %v461 = vstv %s91
    %v462 = vmul.f32 %v310, %v461
    %v463 = vadd.f32 %v460, %v462
    %v464 = vstv %s92
    %v465 = vmul.f32 %v321, %v464
    %v466 = vadd.f32 %v463, %v465
    %v467 = vstv %s93
    %v468 = vmul.f32 %v332, %v467
    %v469 = vadd.f32 %v466, %v468
    %v470 = vstv %s106
    %v471 = vadd.f32 %v469, %v470
    %v472 = vmax.f32 %v471, 0.0
    %v473 = vstv %s94
    %v474 = vmul.f32 %v277, %v473
    %v475 = vstv %s95
    %v476 = vmul.f32 %v288, %v475
    %v477 = vadd.f32 %v474, %v476
    %v478 = vstv %s96
    %v479 = vmul.f32 %v299, %v478
    %v480 = vadd.f32 %v477, %v479
    %v481 = vstv %s97
    %v482 = vmul.f32 %v310, %v481
    %v483 = vadd.f32 %v480, %v482
    %v484 = vstv %s98
    %v485 = vmul.f32 %v321, %v484
    %v486 = vadd.f32 %v483, %v485
    %v487 = vstv %s99
    %v488 = vmul.f32 %v332, %v487
    %v489 = vadd.f32 %v486, %v488
    %v490 = vstv %s107
    %v491 = vadd.f32 %v489, %v490
    %v492 = vmax.f32 %v491, 0.0
    %v493 = vstv %s108
    %v494 = vmul.f32 %v352, %v493
    %v495 = vstv %s109
    %v496 = vmul.f32 %v372, %v495
    %v497 = vadd.f32 %v494, %v496
    %v498 = vstv %s110
    %v499 = vmul.f32 %v392, %v498
    %v500 = vadd.f32 %v497, %v499
    %v501 = vstv %s111
    %v502 = vmul.f32 %v412, %v501
    %v503 = vadd.f32 %v500, %v502
    %v504 = vstv %s112
    %v505 = vmul.f32 %v432, %v504
    %v506 = vadd.f32 %v503, %v505
    %v507 = vstv %s113
    %v508 = vmul.f32 %v452, %v507
    %v509 = vadd.f32 %v506, %v508
    %v510 = vstv %s114
    %v511 = vmul.f32 %v472, %v510
    %v512 = vadd.f32 %v509, %v511
    %v513 = vstv %s115
    %v514 = vmul.f32 %v492, %v513
    %v515 = vadd.f32 %v512, %v514
    %v516 = vstv %s172
    %v517 = vadd.f32 %v515, %v516
    %v518 = vmax.f32 %v517, 0.0
    %v519 = vstv %s116
    %v520 = vmul.f32 %v352, %v519
    %v521 = vstv %s117
    %v522 = vmul.f32 %v372, %v521
    %v523 = vadd.f32 %v520, %v522
    %v524 = vstv %s118
    %v525 = vmul.f32 %v392, %v524
    %v526 = vadd.f32 %v523, %v525
    %v527 = vstv %s119
    %v528 = vmul.f32 %v412, %v527
    %v529 = vadd.f32 %v526, %v528
    %v530 = vstv %s120
    %v531 = vmul.f32 %v432, %v530
    %v532 = vadd.f32 %v529, %v531
    %v533 = vstv %s121
    %v534 = vmul.f32 %v452, %v533
    %v535 = vadd.f32 %v532, %v534
    %v536 = vstv %s122
    %v537 = vmul.f32 %v472, %v536
    %v538 = vadd.f32 %v535, %v537
    %v539 = vstv %s123
    %v540 = vmul.f32 %v492, %v539
    %v541 = vadd.f32 %v538, %v540
    %v542 = vstv %s173
    %v543 = vadd.f32 %v541, %v542
    %v544 = vmax.f32 %v543, 0.0
    %v545 = vstv %s124
    %v546 = vmul.f32 %v352, %v545
    %v547 = vstv %s125
    %v548 = vmul.f32 %v372, %v547
    %v549 = vadd.f32 %v546, %v548
    %v550 = vstv %s126
    %v551 = vmul.f32 %v392, %v550
    %v552 = vadd.f32 %v549, %v551
    %v553 = vstv %s127
    %v554 = vmul.f32 %v412, %v553
    %v555 = vadd.f32 %v552, %v554
    %v556 = vstv %s128
    %v557 = vmul.f32 %v432, %v556
    %v558 = vadd.f32 %v555, %v557
    %v559 = vstv %s129
    %v560 = vmul.f32 %v452, %v559
    %v561 = vadd.f32 %v558, %v560
    %v562 = vstv %s130
    %v563 = vmul.f32 %v472, %v562
    %v564 = vadd.f32 %v561, %v563
    %v565 = vstv %s131
    %v566 = vmul.f32 %v492, %v565
    %v567 = vadd.f32 %v564, %v566
    %v568 = vstv %s174
    %v569 = vadd.f32 %v567, %v568
    %v570 = vmax.f32 %v569, 0.0
    %v571 = vstv %s132
    %v572 = vmul.f32 %v352, %v571
    %v573 = vstv %s133
    %v574 = vmul.f32 %v372, %v573
    %v575 = vadd.f32 %v572, %v574
    %v576 = vstv %s134
    %v577 = vmul.f32 %v392, %v576
    %v578 = vadd.f32 %v575, %v577
    %v579 = vstv %s135
    %v580 = vmul.f32 %v412, %v579
    %v581 = vadd.f32 %v578, %v580
    %v582 = vstv %s136
    %v583 = vmul.f32 %v432, %v582
    %v584 = vadd.f32 %v581, %v583
    %v585 = vstv %s137
    %v586 = vmul.f32 %v452, %v585
    %v587 = vadd.f32 %v584, %v586
    %v588 = vstv %s138
    %v589 = vmul.f32 %v472, %v588
    %v590 = vadd.f32 %v587, %v589
    %v591 = vstv %s139
    %v592 = vmul.f32 %v492, %v591
    %v593 = vadd.f32 %v590, %v592
    %v594 = vstv %s175
    %v595 = vadd.f32 %v593, %v594
    %v596 = vmax.f32 %v595, 0.0
    %v597 = vstv %s140
    %v598 = vmul.f32 %v352, %v597
    %v599 = vstv %s141
    %v600 = vmul.f32 %v372, %v599
    %v601 = vadd.f32 %v598, %v600
    %v602 = vstv %s142
    %v603 = vmul.f32 %v392, %v602
    %v604 = vadd.f32 %v601, %v603
    %v605 = vstv %s143
    %v606 = vmul.f32 %v412, %v605
    %v607 = vadd.f32 %v604, %v606
    %v608 = vstv %s144
    %v609 = vmul.f32 %v432, %v608
    %v610 = vadd.f32 %v607, %v609
    %v611 = vstv %s145
    %v612 = vmul.f32 %v452, %v611
    %v613 = vadd.f32 %v610, %v612
    %v614 = vstv %s146
    %v615 = vmul.f32 %v472, %v614
    %v616 = vadd.f32 %v613, %v615
    %v617 = vstv %s147
    %v618 = vmul.f32 %v492, %v617
    %v619 = vadd.f32 %v616, %v618
    %v620 = vstv %s176
    %v621 = vadd.f32 %v619, %v620
    %v622 = vmax.f32 %v621, 0.0
    %v623 = vstv %s148
    %v624 = vmul.f32 %v352, %v623
    %v625 = vstv %s149
    %v626 = vmul.f32 %v372, %v625
    %v627 = vadd.f32 %v624, %v626
    %v628 = vstv %s150
    %v629 = vmul.f32 %v392, %v628
    %v630 = vadd.f32 %v627, %v629
    %v631 = vstv %s151
    %v632 = vmul.f32 %v412, %v631
    %v633 = vadd.f32 %v630, %v632
    %v634 = vstv %s152
    %v635 = vmul.f32 %v432, %v634
    %v636 = vadd.f32 %v633, %v635
    %v637 = vstv %s153
    %v638 = vmul.f32 %v452, %v637
    %v639 = vadd.f32 %v636, %v638
    %v640 = vstv %s154
    %v641 = vmul.f32 %v472, %v640
    %v642 = vadd.f32 %v639, %v641
    %v643 = vstv %s155
    %v644 = vmul.f32 %v492, %v643
    %v645 = vadd.f32 %v642, %v644
    %v646 = vstv %s177
    %v647 = vadd.f32 %v645, %v646
    %v648 = vmax.f32 %v647, 0.0
    %v649 = vstv %s156
    %v650 = vmul.f32 %v352, %v649
    %v651 = vstv %s157
    %v652 = vmul.f32 %v372, %v651
    %v653 = vadd.f32 %v650, %v652
    %v654 = vstv %s158
    %v655 = vmul.f32 %v392, %v654
    %v656 = vadd.f32 %v653, %v655
    %v657 = vstv %s159
    %v658 = vmul.f32 %v412, %v657
    %v659 = vadd.f32 %v656, %v658
    %v660 = vstv %s160
    %v661 = vmul.f32 %v432, %v660
    %v662 = vadd.f32 %v659, %v661
    %v663 = vstv %s161
    %v664 = vmul.f32 %v452, %v663
    %v665 = vadd.f32 %v662, %v664
    %v666 = vstv %s162
    %v667 = vmul.f32 %v472, %v666
    %v668 = vadd.f32 %v665, %v667
    %v669 = vstv %s163
    %v670 = vmul.f32 %v492, %v669
    %v671 = vadd.f32 %v668, %v670
    %v672 = vstv %s178
    %v673 = vadd.f32 %v671, %v672
    %v674 = vmax.f32 %v673, 0.0
    %v675 = vstv %s164
    %v676 = vmul.f32 %v352, %v675
    %v677 = vstv %s165
    %v678 = vmul.f32 %v372, %v677
    %v679 = vadd.f32 %v676, %v678
    %v680 = vstv %s166
    %v681 = vmul.f32 %v392, %v680
    %v682 = vadd.f32 %v679, %v681
    %v683 = vstv %s167
    %v684 = vmul.f32 %v412, %v683
    %v685 = vadd.f32 %v682, %v684
    %v686 = vstv %s168
    %v687 = vmul.f32 %v432, %v686
    %v688 = vadd.f32 %v685, %v687
    %v689 = vstv %s169
    %v690 = vmul.f32 %v452, %v689
    %v691 = vadd.f32 %v688, %v690
    %v692 = vstv %s170
    %v693 = vmul.f32 %v472, %v692
    %v694 = vadd.f32 %v691, %v693
    %v695 = vstv %s171
    %v696 = vmul.f32 %v492, %v695
    %v697 = vadd.f32 %v694, %v696
    %v698 = vstv %s179
    %v699 = vadd.f32 %v697, %v698
    %v700 = vmax.f32 %v699, 0.0
    %v701 = vstv %s180
    %v702 = vmul.f32 %v518, %v701
    %v703 = vstv %s181
    %v704 = vmul.f32 %v544, %v703
    %v705 = vadd.f32 %v702, %v704
    %v706 = vstv %s182
    %v707 = vmul.f32 %v570, %v706
    %v708 = vadd.f32 %v705, %v707
    %v709 = vstv %s183
    %v710 = vmul.f32 %v596, %v709
    %v711 = vadd.f32 %v708, %v710
    %v712 = vstv %s184
    %v713 = vmul.f32 %v622, %v712
    %v714 = vadd.f32 %v711, %v713
    %v715 = vstv %s185
    %v716 = vmul.f32 %v648, %v715
    %v717 = vadd.f32 %v714, %v716
    %v718 = vstv %s186
    %v719 = vmul.f32 %v674, %v718
    %v720 = vadd.f32 %v717, %v719
    %v721 = vstv %s187
    %v722 = vmul.f32 %v700, %v721
    %v723 = vadd.f32 %v720, %v722
    %v724 = vstv %s228
    %v725 = vadd.f32 %v723, %v724
    %v726 = vmax.f32 %v725, 0.0
    %v727 = vstv %s188
    %v728 = vmul.f32 %v518, %v727
    %v729 = vstv %s189
    %v730 = vmul.f32 %v544, %v729
    %v731 = vadd.f32 %v728, %v730
    %v732 = vstv %s190
    %v733 = vmul.f32 %v570, %v732
    %v734 = vadd.f32 %v731, %v733
    %v735 = vstv %s191
    %v736 = vmul.f32 %v596, %v735
    %v737 = vadd.f32 %v734, %v736
    %v738 = vstv %s192
    %v739 = vmul.f32 %v622, %v738
    %v740 = vadd.f32 %v737, %v739
    %v741 = vstv %s193
    %v742 = vmul.f32 %v648, %v741
    %v743 = vadd.f32 %v740, %v742
    %v744 = vstv %s194
    %v745 = vmul.f32 %v674, %v744
    %v746 = vadd.f32 %v743, %v745
    %v747 = vstv %s195
    %v748 = vmul.f32 %v700, %v747
    %v749 = vadd.f32 %v746, %v748
    %v750 = vstv %s229
    %v751 = vadd.f32 %v749, %v750
    %v752 = vmax.f32 %v751, 0.0
    %v753 = vstv %s196
    %v754 = vmul.f32 %v518, %v753
    %v755 = vstv %s197
    %v756 = vmul.f32 %v544, %v755
    %v757 = vadd.f32 %v754, %v756
    %v758 = vstv %s198
    %v759 = vmul.f32 %v570, %v758
    %v760 = vadd.f32 %v757, %v759
    %v761 = vstv %s199
    %v762 = vmul.f32 %v596, %v761
    %v763 = vadd.f32 %v760, %v762
    %v764 = vstv %s200
    %v765 = vmul.f32 %v622, %v764
    %v766 = vadd.f32 %v763, %v765
    %v767 = vstv %s201
    %v768 = vmul.f32 %v648, %v767
    %v769 = vadd.f32 %v766, %v768
    %v770 = vstv %s202
    %v771 = vmul.f32 %v674, %v770
    %v772 = vadd.f32 %v769, %v771
    %v773 = vstv %s203
    %v774 = vmul.f32 %v700, %v773
    %v775 = vadd.f32 %v772, %v774
    %v776 = vstv %s230
    %v777 = vadd.f32 %v775, %v776
    %v778 = vmax.f32 %v777, 0.0
    %v779 = vstv %s204
    %v780 = vmul.f32 %v518, %v779
    %v781 = vstv %s205
    %v782 = vmul.f32 %v544, %v781
    %v783 = vadd.f32 %v780, %v782
    %v784 = vstv %s206
    %v785 = vmul.f32 %v570, %v784
    %v786 = vadd.f32 %v783, %v785
    %v787 = vstv %s207
    %v788 = vmul.f32 %v596, %v787
    %v789 = vadd.f32 %v786, %v788
    %v790 = vstv %s208
    %v791 = vmul.f32 %v622, %v790
    %v792 = vadd.f32 %v789, %v791
    %v793 = vstv %s209
    %v794 = vmul.f32 %v648, %v793
    %v795 = vadd.f32 %v792, %v794
    %v796 = vstv %s210
    %v797 = vmul.f32 %v674, %v796
    %v798 = vadd.f32 %v795, %v797
    %v799 = vstv %s211
    %v800 = vmul.f32 %v700, %v799
    %v801 = vadd.f32 %v798, %v800
    %v802 = vstv %s231
    %v803 = vadd.f32 %v801, %v802
    %v804 = vmax.f32 %v803, 0.0
    %v805 = vstv %s212
    %v806 = vmul.f32 %v518, %v805
    %v807 = vstv %s213
    %v808 = vmul.f32 %v544, %v807
    %v809 = vadd.f32 %v806, %v808
    %v810 = vstv %s214
    %v811 = vmul.f32 %v570, %v810
    %v812 = vadd.f32 %v809, %v811
    %v813 = vstv %s215
    %v814 = vmul.f32 %v596, %v813
    %v815 = vadd.f32 %v812, %v814
    %v816 = vstv %s216
    %v817 = vmul.f32 %v622, %v816
    %v818 = vadd.f32 %v815, %v817
    %v819 = vstv %s217
    %v820 = vmul.f32 %v648, %v819
    %v821 = vadd.f32 %v818, %v820
    %v822 = vstv %s218
    %v823 = vmul.f32 %v674, %v822
    %v824 = vadd.f32 %v821, %v823
    %v825 = vstv %s219
    %v826 = vmul.f32 %v700, %v825
    %v827 = vadd.f32 %v824, %v826
    %v828 = vstv %s232
    %v829 = vadd.f32 %v827, %v828
    %v830 = vmax.f32 %v829, 0.0
    %v831 = vstv %s220
    %v832 = vmul.f32 %v518, %v831
    %v833 = vstv %s221
    %v834 = vmul.f32 %v544, %v833
    %v835 = vadd.f32 %v832, %v834
    %v836 = vstv %s222
    %v837 = vmul.f32 %v570, %v836
    %v838 = vadd.f32 %v835, %v837
    %v839 = vstv %s223
    %v840 = vmul.f32 %v596, %v839
    %v841 = vadd.f32 %v838, %v840
    %v842 = vstv %s224
    %v843 = vmul.f32 %v622, %v842
    %v844 = vadd.f32 %v841, %v843
    %v845 = vstv %s225
    %v846 = vmul.f32 %v648, %v845
    %v847 = vadd.f32 %v844, %v846
    %v848 = vstv %s226
    %v849 = vmul.f32 %v674, %v848
    %v850 = vadd.f32 %v847, %v849
    %v851 = vstv %s227
    %v852 = vmul.f32 %v700, %v851
    %v853 = vadd.f32 %v850, %v852
    %v854 = vstv %s233
    %v855 = vadd.f32 %v853, %v854
    %v856 = vmax.f32 %v855, 0.0
    %v857 = vstv %s234
    %v858 = vmul.f32 %v726, %v857
    %v859 = vstv %s235
    %v860 = vmul.f32 %v752, %v859
    %v861 = vadd.f32 %v858, %v860
    %v862 = vstv %s236
    %v863 = vmul.f32 %v778, %v862
    %v864 = vadd.f32 %v861, %v863
    %v865 = vstv %s237
    %v866 = vmul.f32 %v804, %v865
    %v867 = vadd.f32 %v864, %v866
    %v868 = vstv %s238
    %v869 = vmul.f32 %v830, %v868
    %v870 = vadd.f32 %v867, %v869
    %v871 = vstv %s239
    %v872 = vmul.f32 %v856, %v871
    %v873 = vadd.f32 %v870, %v872
    %v874 = vstv %s258
    %v875 = vadd.f32 %v873, %v874
    %v876 = vstv %s240
    %v877 = vmul.f32 %v726, %v876
    %v878 = vstv %s241
    %v879 = vmul.f32 %v752, %v878
    %v880 = vadd.f32 %v877, %v879
    %v881 = vstv %s242
    %v882 = vmul.f32 %v778, %v881
    %v883 = vadd.f32 %v880, %v882
    %v884 = vstv %s243
    %v885 = vmul.f32 %v804, %v884
    %v886 = vadd.f32 %v883, %v885
    %v887 = vstv %s244
    %v888 = vmul.f32 %v830, %v887
    %v889 = vadd.f32 %v886, %v888
    %v890 = vstv %s245
    %v891 = vmul.f32 %v856, %v890
    %v892 = vadd.f32 %v889, %v891
    %v893 = vstv %s259
    %v894 = vadd.f32 %v892, %v893
    %v895 = vstv %s246
    %v896 = vmul.f32 %v726, %v895
    %v897 = vstv %s247
    %v898 = vmul.f32 %v752, %v897
    %v899 = vadd.f32 %v896, %v898
    %v900 = vstv %s248
    %v901 = vmul.f32 %v778, %v900
    %v902 = vadd.f32 %v899, %v901
    %v903 = vstv %s249
    %v904 = vmul.f32 %v804, %v903
    %v905 = vadd.f32 %v902, %v904
    %v906 = vstv %s250
    %v907 = vmul.f32 %v830, %v906
    %v908 = vadd.f32 %v905, %v907
    %v909 = vstv %s251
    %v910 = vmul.f32 %v856, %v909
    %v911 = vadd.f32 %v908, %v910
    %v912 = vstv %s260
    %v913 = vadd.f32 %v911, %v912
    %v914 = vstv %s252
    %v915 = vmul.f32 %v726, %v914
    %v916 = vstv %s253
    %v917 = vmul.f32 %v752, %v916
    %v918 = vadd.f32 %v915, %v917
    %v919 = vstv %s254
    %v920 = vmul.f32 %v778, %v919
    %v921 = vadd.f32 %v918, %v920
    %v922 = vstv %s255
    %v923 = vmul.f32 %v804, %v922
    %v924 = vadd.f32 %v921, %v923
    %v925 = vstv %s256
    %v926 = vmul.f32 %v830, %v925
    %v927 = vadd.f32 %v924, %v926
    %v928 = vstv %s257
    %v929 = vmul.f32 %v856, %v928
    %v930 = vadd.f32 %v927, %v929
    %v931 = vstv %s261
    %v932 = vadd.f32 %v930, %v931
    %933 = vst [vmem:[#allocation7] sm:$0xff] %v875
    %s934 = scalar_lea.vmem [#allocation7], 8
    %935 = vst [vmem:[%s934] sm:$0xff] %v894
    %s936 = scalar_lea.vmem [#allocation7], 16
    %937 = vst [vmem:[%s936] sm:$0xff] %v913
    %s938 = scalar_lea.vmem [#allocation7], 24
    %939 = vst [vmem:[%s938] sm:$0xff] %v932
    // Predicated region
    $region10: #{tpu_custom_call.1} parent=1 // pred_check
      _
    $region11: #{tpu_custom_call.1} parent=1 // pred_check_branch
      %941 = sbr.rel (0) target = $region13
    $region12: #{tpu_custom_call.1} parent=1 // pred_region
      %s943 = ssub.s32 512, 512
      %944 = vsyncadd [#allocation6], %s943
      %s945 = sshll.u32 [#allocation7], 4
      %s946 = int_to_ptr.vmem [resolvable:$true] %s945
      %951 = dma.vmem_to_hbm [thread:$0]  %s946, 512, %s2, [#allocation6], 128, 128, 8
    $region13: #{tpu_custom_call.1} parent=1 // pred_fallthru
      _
    // Predicated region
    $region14: #{tpu_custom_call.1} parent=1 // pred_check
      _
    $region15: #{tpu_custom_call.1} parent=1 // pred_check_branch
      %953 = sbr.rel (0) target = $region17
    $region16: #{tpu_custom_call.1} parent=1 // pred_region
      %954 = dma.done [#allocation6], 512
    $region17: #{tpu_custom_call.1} parent=1 // pred_fallthru
      _
    %955 = vsyncpa [#allocation5], 1
    %956 = vsyncpa [#allocation6], 1

</llo_original>
